<compile_context>
chip_gen: v7x
topology: tpu7x:2x2x1
jax: 0.10.0
libtpu: 0.0.40
codegen_flags: <defaults>
</compile_context>

<pallas_src>
import functools

import jax
import jax.numpy as jnp
from jax import lax
from jax.experimental import pallas as pl
from jax.experimental.pallas import tpu as pltpu

# ----- model hyper-parameters (module globals in the PyTorch code) -----------
d_model = 32
d_k = 8
d_v = 8
n_heads = 4
LN_EPS = 1e-5
NEG_INF = -1000000000.0


def _mha_kernel(q_ref, k_ref, v_ref, bias_ref,
                wq_ref, bq_ref, wk_ref, bk_ref, wv_ref, bv_ref,
                wo_ref, bo_ref, gamma_ref, beta_ref,
                out_ref, attn_ref=None, *, approx_recip=False):
    """One grid step == one block of `block_b` batch elements."""
    f32 = jnp.float32
    cdt = q_ref.dtype                      # MXU operand dtype (f32 or bf16)
    block_b, sq, _ = q_ref.shape
    sk = k_ref.shape[1]

    # Flatten batch into rows so the projections are single big matmuls.
    # (Only sublane-major dims are merged; the lane axis is untouched.)
    x_q = q_ref[...].reshape(block_b * sq, d_model)
    x_k = k_ref[...].reshape(block_b * sk, d_model)
    x_v = v_ref[...].reshape(block_b * sk, d_model)

    # --- linear projections: y = x @ W + b  (W stored as [in, out]) ---
    # Operands stay in io dtype (native bf16 MXU path), accumulate in f32.
    # 1/sqrt(d_k) is folded into the (small) projected Q instead of the scores.
    scale = f32(1.0) / jnp.sqrt(f32(d_k))
    q_p = ((jnp.dot(x_q, wq_ref[...], preferred_element_type=f32)
            + bq_ref[0].astype(f32)) * scale).astype(cdt)
    k_p = (jnp.dot(x_k, wk_ref[...], preferred_element_type=f32)
           + bk_ref[0].astype(f32)).astype(cdt)
    v_p = (jnp.dot(x_v, wv_ref[...], preferred_element_type=f32)
           + bv_ref[0].astype(f32)).astype(cdt)

    # Per-batch views; lane axis stays H*dk = 32 wide.
    q_b = q_p.reshape(block_b, sq, n_heads * d_k)
    k_b = k_p.reshape(block_b, sk, n_heads * d_k)
    v_b = v_p.reshape(block_b, sk, n_heads * d_v)

    # Additive mask bias, (block_b, 1, sk) or (block_b, sq, sk); broadcast below.
    bias = bias_ref[...].astype(f32)

    # Output accumulator (f32): residual + output-projection bias, per-head
    # projected context is accumulated into it inside the loop (no concat).
    acc = x_q.astype(f32) + bo_ref[0].astype(f32)

    for h in range(n_heads):
        qh = q_b[:, :, h * d_k:(h + 1) * d_k]          # (B, sq, dk)
        kh = k_b[:, :, h * d_k:(h + 1) * d_k]          # (B, sk, dk)
        vh = v_b[:, :, h * d_v:(h + 1) * d_v]          # (B, sk, dv)

        s = jnp.einsum('bqd,bkd->bqk', qh, kh,
                       preferred_element_type=f32) + bias      # (B, sq, sk) f32
        m = jnp.max(s, axis=-1, keepdims=True)
        e = jnp.exp(s - m)
        inv = pl.reciprocal(jnp.sum(e, axis=-1, keepdims=True),
                            approx=approx_recip)
        p = e * inv                                             # softmax, f32

        if attn_ref is not None:
            # lane-dense per-head writeback: heads concatenated along lanes
            attn_ref[:, :, h * sk:(h + 1) * sk] = p.astype(attn_ref.dtype)

        c = jnp.einsum('bqk,bkd->bqd', p.astype(cdt), vh,
                       preferred_element_type=f32)              # (B, sq, dv)
        acc = acc + jnp.dot(c.astype(cdt).reshape(block_b * sq, d_v),
                            wo_ref[h * d_v:(h + 1) * d_v, :],
                            preferred_element_type=f32)

    # --- LayerNorm (all math in f32) ---
    mean = jnp.mean(acc, axis=-1, keepdims=True)
    var = jnp.mean((acc - mean) ** 2, axis=-1, keepdims=True)
    y = (acc - mean) * lax.rsqrt(var + f32(LN_EPS))
    y = y * gamma_ref[0].astype(f32) + beta_ref[0].astype(f32)
    out_ref[...] = y.reshape(block_b, sq, d_model).astype(out_ref.dtype)


def _vmem_limit_bytes():
    """Chip-aware scoped-VMEM limit: ~3/4 of physical, capped at 100 MiB."""
    try:
        cap = int(pltpu.get_tpu_info().vmem_capacity_bytes)
    except Exception:
        cap = 64 * 1024 * 1024  # conservative (v7x-sized) fallback
    return max(32 * 1024 * 1024, min(int(0.75 * cap), 100 * 1024 * 1024))


def _pick_block_b(batch, sq, sk, mask_sq, io_bytes, attn_bytes, return_attn,
                  vmem_budget):
    """Largest divisor of `batch` whose per-step VMEM footprint fits the budget,
    then shrunk (if possible) so there are >=2 grid steps for megacore /
    DMA-compute overlap."""
    def est_bytes(bb):
        rows_q, rows_k = bb * sq, bb * sk
        # double-buffered DMA blocks (Q, K, V, out)
        b = 2 * io_bytes * (2 * rows_q * d_model + 2 * rows_k * d_model)
        b += 2 * 4 * bb * mask_sq * sk                       # f32 mask bias
        if return_attn:
            b += 2 * attn_bytes * rows_q * n_heads * sk      # lane-dense attn
        # live in-kernel values (conservative)
        b += io_bytes * (rows_q + 2 * rows_k) * n_heads * d_k   # q_p/k_p/v_p
        b += 4 * 4 * bb * sq * sk                                # one head s/e/p
        b += 4 * rows_q * d_model                                # f32 accumulator
        b += 4 * 4 * d_model * n_heads * d_k                     # weights (2x buf)
        return b

    divisors = [d for d in range(1, batch + 1) if batch % d == 0]
    fitting = [d for d in divisors if est_bytes(d) <= vmem_budget]
    bb = max(fitting) if fitting else 1
    while bb > 1 and batch // bb < 2:
        bb = max(d for d in divisors if d < bb)
    return bb


@functools.partial(jax.jit,
                   static_argnames=("return_attn", "io_dtype", "attn_dtype"))
def multi_head_attention(Q, K, V, attn_mask, params, *,
                         return_attn=True, io_dtype=jnp.float32,
                         attn_dtype=None):
    """Q,K,V: [B, S, d_model]; attn_mask: [B, Sq, Sk] or [B, 1, Sk]
    (value 1.0 == masked, as in the PyTorch masked_fill).

    Returns (out [B,Sq,d_model], attn [B,H,Sq,Sk]) or just `out` when
    return_attn=False.  io_dtype=jnp.bfloat16 halves HBM traffic and feeds the
    MXU native bf16; softmax/LayerNorm math stays f32.  attn_dtype lets the
    O(S^2) attention-weights stream be narrower than io_dtype.
    """
    B, Sq, _ = Q.shape
    Sk = K.shape[1]
    io_dtype = jnp.dtype(io_dtype)
    attn_dtype = jnp.dtype(attn_dtype) if attn_dtype is not None else io_dtype
    mask_sq = attn_mask.shape[1]          # 1 (padding mask) or Sq (general)

    (wq, bq, wk, bk, wv, bv, wo, bo, gamma, beta) = params

    cast = lambda x: x.astype(io_dtype)
    Qc, Kc, Vc = cast(Q), cast(K), cast(V)
    # additive mask bias, kept in f32 (tiny when (B,1,Sk)); replaces cmp+select
    bias = attn_mask.astype(jnp.float32) * jnp.float32(NEG_INF)

    wq_, wk_, wv_, wo_ = cast(wq), cast(wk), cast(wv), cast(wo)
    # biases / LN params as 2-D [1, N] so block shapes satisfy TPU layout rules
    bq2, bk2, bv2 = cast(bq).reshape(1, -1), cast(bk).reshape(1, -1), cast(bv).reshape(1, -1)
    bo2, g2, be2 = cast(bo).reshape(1, -1), cast(gamma).reshape(1, -1), cast(beta).reshape(1, -1)

    vmem_limit = _vmem_limit_bytes()
    block_b = _pick_block_b(B, Sq, Sk, mask_sq, io_dtype.itemsize,
                            attn_dtype.itemsize, return_attn,
                            vmem_budget=int(0.6 * vmem_limit))
    grid = (B // block_b,)

    def blk(shape):
        return pl.BlockSpec(shape, lambda b: (b,) + (0,) * (len(shape) - 1))

    def full(arr):
        return pl.BlockSpec(arr.shape, lambda b: (0,) * arr.ndim)

    in_specs = [
        blk((block_b, Sq, d_model)),       # Q
        blk((block_b, Sk, d_model)),       # K
        blk((block_b, Sk, d_model)),       # V
        blk((block_b, mask_sq, Sk)),       # additive mask bias
        full(wq_), full(bq2), full(wk_), full(bk2), full(wv_), full(bv2),
        full(wo_), full(bo2), full(g2), full(be2),
    ]

    out_shapes = [jax.ShapeDtypeStruct((B, Sq, d_model), io_dtype)]
    out_specs = [blk((block_b, Sq, d_model))]
    if return_attn:
        # lane-dense attn output: (B, Sq, H*Sk); rearranged to (B,H,Sq,Sk) below
        out_shapes.append(jax.ShapeDtypeStruct((B, Sq, n_heads * Sk), attn_dtype))
        out_specs.append(blk((block_b, Sq, n_heads * Sk)))

    kernel = functools.partial(
        _mha_kernel, approx_recip=(io_dtype == jnp.dtype(jnp.bfloat16)))

    results = pl.pallas_call(
        kernel,
        out_shape=tuple(out_shapes),
        grid_spec=pltpu.PrefetchScalarGridSpec(
            num_scalar_prefetch=0,
            grid=grid,
            in_specs=in_specs,
            out_specs=tuple(out_specs),
        ),
        compiler_params=pltpu.CompilerParams(
            dimension_semantics=("parallel",),
            vmem_limit_bytes=vmem_limit),
    )(Qc, Kc, Vc, bias,
      wq_, bq2, wk_, bk2, wv_, bv2, wo_, bo2, g2, be2)

    if return_attn:
        out, attn_lane = results
        attn = attn_lane.reshape(B, Sq, n_heads, Sk).transpose(0, 2, 1, 3)
        return out, attn
    (out,) = results
    return out


def init_params(key):
    """Deterministic parameter init. Linear weights stored as [in, out]."""
    ks = jax.random.split(key, 8)
    scale_in = 1.0 / jnp.sqrt(jnp.float32(d_model))
    scale_ctx = 1.0 / jnp.sqrt(jnp.float32(n_heads * d_v))
    wq = jax.random.uniform(ks[0], (d_model, d_k * n_heads), jnp.float32,
                            -scale_in, scale_in)
    bq = jax.random.uniform(ks[1], (d_k * n_heads,), jnp.float32, -scale_in, scale_in)
    wk = jax.random.uniform(ks[2], (d_model, d_k * n_heads), jnp.float32,
                            -scale_in, scale_in)
    bk = jax.random.uniform(ks[3], (d_k * n_heads,), jnp.float32, -scale_in, scale_in)
    wv = jax.random.uniform(ks[4], (d_model, d_v * n_heads), jnp.float32,
                            -scale_in, scale_in)
    bv = jax.random.uniform(ks[5], (d_v * n_heads,), jnp.float32, -scale_in, scale_in)
    wo = jax.random.uniform(ks[6], (n_heads * d_v, d_model), jnp.float32,
                            -scale_ctx, scale_ctx)
    bo = jax.random.uniform(ks[7], (d_model,), jnp.float32, -scale_ctx, scale_ctx)
    gamma = jnp.ones((d_model,), jnp.float32)
    beta = jnp.zeros((d_model,), jnp.float32)
    return (wq, bq, wk, bk, wv, bv, wo, bo, gamma, beta)


def reference(Q, K, V, attn_mask, params):
    """Plain-JAX reference mirroring the PyTorch forward (masked_fill)."""
    (wq, bq, wk, bk, wv, bv, wo, bo, gamma, beta) = params
    B, Sq, _ = Q.shape
    Sk = K.shape[1]
    q_s = (Q @ wq + bq).reshape(B, Sq, n_heads, d_k).transpose(0, 2, 1, 3)
    k_s = (K @ wk + bk).reshape(B, Sk, n_heads, d_k).transpose(0, 2, 1, 3)
    v_s = (V @ wv + bv).reshape(B, Sk, n_heads, d_v).transpose(0, 2, 1, 3)
    scores = jnp.einsum('bhqd,bhkd->bhqk', q_s, k_s) / jnp.sqrt(jnp.float32(d_k))
    scores = jnp.where(attn_mask[:, None] > 0.5, NEG_INF, scores)
    attn = jax.nn.softmax(scores, axis=-1)
    ctx = jnp.einsum('bhqk,bhkd->bhqd', attn, v_s).transpose(0, 2, 1, 3)
    ctx = ctx.reshape(B, Sq, n_heads * d_v)
    out = ctx @ wo + bo + Q
    mean = out.mean(-1, keepdims=True)
    var = ((out - mean) ** 2).mean(-1, keepdims=True)
    return (out - mean) / jnp.sqrt(var + LN_EPS) * gamma + beta, attn


if __name__ == "__main__":
    key = jax.random.PRNGKey(0)
    kq, kk, kv, kp = jax.random.split(key, 4)

    B, S = 2, 8
    Q = jax.random.normal(kq, (B, S, d_model), jnp.float32)
    K = jax.random.normal(kk, (B, S, d_model), jnp.float32)
    V = jax.random.normal(kv, (B, S, d_model), jnp.float32)
    params = init_params(kp)

    # 1) padding-style mask passed compactly as (B, 1, Sk): last two keys masked
    pad_row = jnp.concatenate([jnp.zeros((S - 2,)), jnp.ones((2,))]).astype(jnp.float32)
    pad_mask = jnp.broadcast_to(pad_row, (B, 1, S))
    ref_out, ref_attn = reference(Q, K, V, pad_mask, params)

    out, attn = multi_head_attention(Q, K, V, pad_mask, params)
    jax.block_until_ready((out, attn))
    assert jnp.allclose(out, ref_out, atol=1e-4, rtol=1e-4)
    assert jnp.allclose(attn, ref_attn, atol=1e-5, rtol=1e-5)

    # 2) general (B, Sq, Sk) mask (causal) + attn-skipping fast path
    causal = (jnp.arange(S)[None, :] > jnp.arange(S)[:, None]).astype(jnp.float32)
    causal = jnp.broadcast_to(causal, (B, S, S))
    ref_out_c, _ = reference(Q, K, V, causal, params)
    out_c = multi_head_attention(Q, K, V, causal, params, return_attn=False)
    jax.block_until_ready(out_c)
    assert jnp.allclose(out_c, ref_out_c, atol=1e-4, rtol=1e-4)

    # 3) bf16 I/O path (native bf16 MXU operands; f32 softmax / LayerNorm)
    out_bf, attn_bf = multi_head_attention(Q, K, V, pad_mask, params,
                                           io_dtype=jnp.bfloat16)
    jax.block_until_ready((out_bf, attn_bf))
    out_bf32 = out_bf.astype(jnp.float32)
    assert bool(jnp.all(jnp.isfinite(out_bf32)))
    assert bool(jnp.all(jnp.isfinite(attn_bf.astype(jnp.float32))))
    assert float(jnp.max(jnp.abs(out_bf32 - ref_out))) < 0.3

    print("KERNEL_OK")
</pallas_src>

<mosaic_0001>
module attributes {stable_mosaic.version = 11 : i64} {
  func.func @_mha_kernel(%arg0: i32, %arg1: memref<1x8x32xf32, #tpu.memory_space<vmem>>, %arg2: memref<1x8x32xf32, #tpu.memory_space<vmem>>, %arg3: memref<1x8x32xf32, #tpu.memory_space<vmem>>, %arg4: memref<1x1x8xf32, #tpu.memory_space<vmem>>, %arg5: memref<32x32xf32, #tpu.memory_space<vmem>>, %arg6: memref<1x32xf32, #tpu.memory_space<vmem>>, %arg7: memref<32x32xf32, #tpu.memory_space<vmem>>, %arg8: memref<1x32xf32, #tpu.memory_space<vmem>>, %arg9: memref<32x32xf32, #tpu.memory_space<vmem>>, %arg10: memref<1x32xf32, #tpu.memory_space<vmem>>, %arg11: memref<32x32xf32, #tpu.memory_space<vmem>>, %arg12: memref<1x32xf32, #tpu.memory_space<vmem>>, %arg13: memref<1x32xf32, #tpu.memory_space<vmem>>, %arg14: memref<1x32xf32, #tpu.memory_space<vmem>>, %arg15: memref<1x8x32xf32, #tpu.memory_space<vmem>>, %arg16: memref<1x8x32xf32, #tpu.memory_space<vmem>>) attributes {dimension_semantics = [#tpu.dimension_semantics<parallel>], iteration_bounds = array<i64: 2>, scalar_prefetch = 0 : i64, scratch_operands = 0 : i64, tpu.core_type = #tpu.core_type<tc>, window_params = [{transform_indices = @transform_0, window_bounds = array<i64: 1, 8, 32>}, {transform_indices = @transform_1, window_bounds = array<i64: 1, 8, 32>}, {transform_indices = @transform_2, window_bounds = array<i64: 1, 8, 32>}, {transform_indices = @transform_3, window_bounds = array<i64: 1, 1, 8>}, {pipeline_mode = #tpu.pipeline_mode<synchronous>, transform_indices = @transform_4, window_bounds = array<i64: 32, 32>}, {pipeline_mode = #tpu.pipeline_mode<synchronous>, transform_indices = @transform_5, window_bounds = array<i64: 1, 32>}, {pipeline_mode = #tpu.pipeline_mode<synchronous>, transform_indices = @transform_6, window_bounds = array<i64: 32, 32>}, {pipeline_mode = #tpu.pipeline_mode<synchronous>, transform_indices = @transform_7, window_bounds = array<i64: 1, 32>}, {pipeline_mode = #tpu.pipeline_mode<synchronous>, transform_indices = @transform_8, window_bounds = array<i64: 32, 32>}, {pipeline_mode = #tpu.pipeline_mode<synchronous>, transform_indices = @transform_9, window_bounds = array<i64: 1, 32>}, {pipeline_mode = #tpu.pipeline_mode<synchronous>, transform_indices = @transform_10, window_bounds = array<i64: 32, 32>}, {pipeline_mode = #tpu.pipeline_mode<synchronous>, transform_indices = @transform_11, window_bounds = array<i64: 1, 32>}, {pipeline_mode = #tpu.pipeline_mode<synchronous>, transform_indices = @transform_12, window_bounds = array<i64: 1, 32>}, {pipeline_mode = #tpu.pipeline_mode<synchronous>, transform_indices = @transform_13, window_bounds = array<i64: 1, 32>}, {transform_indices = @transform_14, window_bounds = array<i64: 1, 8, 32>}, {transform_indices = @transform_15, window_bounds = array<i64: 1, 8, 32>}]} {
    %c0 = arith.constant 0 : index
    %c0_0 = arith.constant 0 : index
    %c0_1 = arith.constant 0 : index
    %0 = vector.load %arg1[%c0, %c0_0, %c0_1] : memref<1x8x32xf32, #tpu.memory_space<vmem>>, vector<1x8x32xf32>
    %1 = vector.shape_cast %0 : vector<1x8x32xf32> to vector<8x32xf32>
    %c0_2 = arith.constant 0 : index
    %c0_3 = arith.constant 0 : index
    %c0_4 = arith.constant 0 : index
    %2 = vector.load %arg2[%c0_2, %c0_3, %c0_4] : memref<1x8x32xf32, #tpu.memory_space<vmem>>, vector<1x8x32xf32>
    %3 = vector.shape_cast %2 : vector<1x8x32xf32> to vector<8x32xf32>
    %c0_5 = arith.constant 0 : index
    %c0_6 = arith.constant 0 : index
    %c0_7 = arith.constant 0 : index
    %4 = vector.load %arg3[%c0_5, %c0_6, %c0_7] : memref<1x8x32xf32, #tpu.memory_space<vmem>>, vector<1x8x32xf32>
    %5 = vector.shape_cast %4 : vector<1x8x32xf32> to vector<8x32xf32>
    %cst = arith.constant 8.000000e+00 : f32
    %6 = math.sqrt %cst : f32
    %cst_8 = arith.constant 1.000000e+00 : f32
    %7 = arith.divf %cst_8, %6 : f32
    %c0_9 = arith.constant 0 : index
    %c0_10 = arith.constant 0 : index
    %8 = vector.load %arg5[%c0_9, %c0_10] : memref<32x32xf32, #tpu.memory_space<vmem>>, vector<32x32xf32>
    %cst_11 = arith.constant dense<0.000000e+00> : vector<8x32xf32>
    %9 = tpu.matmul %1, %8, %cst_11 {dimension_numbers = #tpu.dot_dimension_numbers<[1], [0], [0], [1], [0, 0, 1, 1], [], []>} : vector<8x32xf32>, vector<32x32xf32>, vector<8x32xf32> -> vector<8x32xf32>
    %c0_12 = arith.constant 0 : index
    %c0_13 = arith.constant 0 : index
    %10 = vector.load %arg6[%c0_12, %c0_13] : memref<1x32xf32, #tpu.memory_space<vmem>>, vector<1x32xf32>
    %11 = vector.shape_cast %10 : vector<1x32xf32> to vector<32xf32>
    %12 = vector.shape_cast %11 : vector<32xf32> to vector<1x32xf32>
    %13 = vector.broadcast %12 : vector<1x32xf32> to vector<8x32xf32>
    %14 = arith.addf %9, %13 : vector<8x32xf32>
    %15 = vector.broadcast %7 : f32 to vector<8x32xf32>
    %16 = arith.mulf %14, %15 : vector<8x32xf32>
    %c0_14 = arith.constant 0 : index
    %c0_15 = arith.constant 0 : index
    %17 = vector.load %arg7[%c0_14, %c0_15] : memref<32x32xf32, #tpu.memory_space<vmem>>, vector<32x32xf32>
    %cst_16 = arith.constant dense<0.000000e+00> : vector<8x32xf32>
    %18 = tpu.matmul %3, %17, %cst_16 {dimension_numbers = #tpu.dot_dimension_numbers<[1], [0], [0], [1], [0, 0, 1, 1], [], []>} : vector<8x32xf32>, vector<32x32xf32>, vector<8x32xf32> -> vector<8x32xf32>
    %c0_17 = arith.constant 0 : index
    %c0_18 = arith.constant 0 : index
    %19 = vector.load %arg8[%c0_17, %c0_18] : memref<1x32xf32, #tpu.memory_space<vmem>>, vector<1x32xf32>
    %20 = vector.shape_cast %19 : vector<1x32xf32> to vector<32xf32>
    %21 = vector.shape_cast %20 : vector<32xf32> to vector<1x32xf32>
    %22 = vector.broadcast %21 : vector<1x32xf32> to vector<8x32xf32>
    %23 = arith.addf %18, %22 : vector<8x32xf32>
    %c0_19 = arith.constant 0 : index
    %c0_20 = arith.constant 0 : index
    %24 = vector.load %arg9[%c0_19, %c0_20] : memref<32x32xf32, #tpu.memory_space<vmem>>, vector<32x32xf32>
    %cst_21 = arith.constant dense<0.000000e+00> : vector<8x32xf32>
    %25 = tpu.matmul %5, %24, %cst_21 {dimension_numbers = #tpu.dot_dimension_numbers<[1], [0], [0], [1], [0, 0, 1, 1], [], []>} : vector<8x32xf32>, vector<32x32xf32>, vector<8x32xf32> -> vector<8x32xf32>
    %c0_22 = arith.constant 0 : index
    %c0_23 = arith.constant 0 : index
    %26 = vector.load %arg10[%c0_22, %c0_23] : memref<1x32xf32, #tpu.memory_space<vmem>>, vector<1x32xf32>
    %27 = vector.shape_cast %26 : vector<1x32xf32> to vector<32xf32>
    %28 = vector.shape_cast %27 : vector<32xf32> to vector<1x32xf32>
    %29 = vector.broadcast %28 : vector<1x32xf32> to vector<8x32xf32>
    %30 = arith.addf %25, %29 : vector<8x32xf32>
    %31 = vector.shape_cast %16 : vector<8x32xf32> to vector<1x8x32xf32>
    %32 = vector.shape_cast %23 : vector<8x32xf32> to vector<1x8x32xf32>
    %33 = vector.shape_cast %30 : vector<8x32xf32> to vector<1x8x32xf32>
    %c0_24 = arith.constant 0 : index
    %c0_25 = arith.constant 0 : index
    %c0_26 = arith.constant 0 : index
    %34 = vector.load %arg4[%c0_24, %c0_25, %c0_26] : memref<1x1x8xf32, #tpu.memory_space<vmem>>, vector<1x1x8xf32>
    %c0_27 = arith.constant 0 : index
    %c0_28 = arith.constant 0 : index
    %35 = vector.load %arg12[%c0_27, %c0_28] : memref<1x32xf32, #tpu.memory_space<vmem>>, vector<1x32xf32>
    %36 = vector.shape_cast %35 : vector<1x32xf32> to vector<32xf32>
    %37 = vector.shape_cast %36 : vector<32xf32> to vector<1x32xf32>
    %38 = vector.broadcast %37 : vector<1x32xf32> to vector<8x32xf32>
    %39 = arith.addf %1, %38 : vector<8x32xf32>
    %40 = vector.extract_strided_slice %31 {offsets = [0, 0, 0], sizes = [1, 8, 8], strides = [1, 1, 1]} : vector<1x8x32xf32> to vector<1x8x8xf32>
    %41 = vector.extract_strided_slice %32 {offsets = [0, 0, 0], sizes = [1, 8, 8], strides = [1, 1, 1]} : vector<1x8x32xf32> to vector<1x8x8xf32>
    %42 = vector.extract_strided_slice %33 {offsets = [0, 0, 0], sizes = [1, 8, 8], strides = [1, 1, 1]} : vector<1x8x32xf32> to vector<1x8x8xf32>
    "tpu.trace_start"() <{level = 10 : i32, message = "bqd,bkd->bqk"}> : () -> ()
    %cst_29 = arith.constant dense<0.000000e+00> : vector<1x8x8xf32>
    %43 = tpu.matmul %40, %41, %cst_29 {dimension_numbers = #tpu.dot_dimension_numbers<[2], [2], [1], [1], [0, 0, 0, 1, 1, 1], [0], [0]>} : vector<1x8x8xf32>, vector<1x8x8xf32>, vector<1x8x8xf32> -> vector<1x8x8xf32>
    "tpu.trace_stop"() : () -> ()
    %44 = vector.broadcast %34 : vector<1x1x8xf32> to vector<1x8x8xf32>
    %45 = arith.addf %43, %44 : vector<1x8x8xf32>
    %cst_30 = arith.constant dense<0xFF800000> : vector<1x8xf32>
    %46 = vector.multi_reduction <maximumf>, %45, %cst_30 [2] : vector<1x8x8xf32> to vector<1x8xf32>
    %47 = vector.shape_cast %46 : vector<1x8xf32> to vector<1x8x1xf32>
    %48 = vector.broadcast %47 : vector<1x8x1xf32> to vector<1x8x8xf32>
    %49 = arith.subf %45, %48 : vector<1x8x8xf32>
    %50 = math.exp %49 : vector<1x8x8xf32>
    %cst_31 = arith.constant dense<0.000000e+00> : vector<1x8xf32>
    %51 = vector.multi_reduction <add>, %50, %cst_31 [2] : vector<1x8x8xf32> to vector<1x8xf32>
    %52 = vector.shape_cast %51 : vector<1x8xf32> to vector<1x8x1xf32>
    %53 = tpu.reciprocal %52 : vector<1x8x1xf32> -> vector<1x8x1xf32>
    %54 = vector.broadcast %53 : vector<1x8x1xf32> to vector<1x8x8xf32>
    %55 = arith.mulf %50, %54 : vector<1x8x8xf32>
    %c0_32 = arith.constant 0 : index
    %c0_33 = arith.constant 0 : index
    %c0_34 = arith.constant 0 : index
    %56 = vector.load %arg16[%c0_32, %c0_33, %c0_34] : memref<1x8x32xf32, #tpu.memory_space<vmem>>, vector<1x8x8xf32>
    tpu.vector_store %arg16[%c0_32, %c0_33, %c0_34], %55 {strides = array<i32>} : memref<1x8x32xf32, #tpu.memory_space<vmem>>, vector<1x8x8xf32>,
    "tpu.trace_start"() <{level = 10 : i32, message = "bqk,bkd->bqd"}> : () -> ()
    %cst_35 = arith.constant dense<0.000000e+00> : vector<1x8x8xf32>
    %57 = tpu.matmul %55, %42, %cst_35 {dimension_numbers = #tpu.dot_dimension_numbers<[2], [1], [1], [2], [0, 0, 0, 1, 1, 2], [0], [0]>} : vector<1x8x8xf32>, vector<1x8x8xf32>, vector<1x8x8xf32> -> vector<1x8x8xf32>
    "tpu.trace_stop"() : () -> ()
    %58 = vector.shape_cast %57 : vector<1x8x8xf32> to vector<8x8xf32>
    %c0_36 = arith.constant 0 : index
    %c0_37 = arith.constant 0 : index
    %59 = vector.load %arg11[%c0_36, %c0_37] : memref<32x32xf32, #tpu.memory_space<vmem>>, vector<8x32xf32>
    %cst_38 = arith.constant dense<0.000000e+00> : vector<8x32xf32>
    %60 = tpu.matmul %58, %59, %cst_38 {dimension_numbers = #tpu.dot_dimension_numbers<[1], [0], [0], [1], [0, 0, 1, 1], [], []>} : vector<8x8xf32>, vector<8x32xf32>, vector<8x32xf32> -> vector<8x32xf32>
    %61 = arith.addf %39, %60 : vector<8x32xf32>
    %62 = vector.extract_strided_slice %31 {offsets = [0, 0, 8], sizes = [1, 8, 8], strides = [1, 1, 1]} : vector<1x8x32xf32> to vector<1x8x8xf32>
    %63 = vector.extract_strided_slice %32 {offsets = [0, 0, 8], sizes = [1, 8, 8], strides = [1, 1, 1]} : vector<1x8x32xf32> to vector<1x8x8xf32>
    %64 = vector.extract_strided_slice %33 {offsets = [0, 0, 8], sizes = [1, 8, 8], strides = [1, 1, 1]} : vector<1x8x32xf32> to vector<1x8x8xf32>
    "tpu.trace_start"() <{level = 10 : i32, message = "bqd,bkd->bqk"}> : () -> ()
    %cst_39 = arith.constant dense<0.000000e+00> : vector<1x8x8xf32>
    %65 = tpu.matmul %62, %63, %cst_39 {dimension_numbers = #tpu.dot_dimension_numbers<[2], [2], [1], [1], [0, 0, 0, 1, 1, 1], [0], [0]>} : vector<1x8x8xf32>, vector<1x8x8xf32>, vector<1x8x8xf32> -> vector<1x8x8xf32>
    "tpu.trace_stop"() : () -> ()
    %66 = vector.broadcast %34 : vector<1x1x8xf32> to vector<1x8x8xf32>
    %67 = arith.addf %65, %66 : vector<1x8x8xf32>
    %cst_40 = arith.constant dense<0xFF800000> : vector<1x8xf32>
    %68 = vector.multi_reduction <maximumf>, %67, %cst_40 [2] : vector<1x8x8xf32> to vector<1x8xf32>
    %69 = vector.shape_cast %68 : vector<1x8xf32> to vector<1x8x1xf32>
    %70 = vector.broadcast %69 : vector<1x8x1xf32> to vector<1x8x8xf32>
    %71 = arith.subf %67, %70 : vector<1x8x8xf32>
    %72 = math.exp %71 : vector<1x8x8xf32>
    %cst_41 = arith.constant dense<0.000000e+00> : vector<1x8xf32>
    %73 = vector.multi_reduction <add>, %72, %cst_41 [2] : vector<1x8x8xf32> to vector<1x8xf32>
    %74 = vector.shape_cast %73 : vector<1x8xf32> to vector<1x8x1xf32>
    %75 = tpu.reciprocal %74 : vector<1x8x1xf32> -> vector<1x8x1xf32>
    %76 = vector.broadcast %75 : vector<1x8x1xf32> to vector<1x8x8xf32>
    %77 = arith.mulf %72, %76 : vector<1x8x8xf32>
    %c0_42 = arith.constant 0 : index
    %c0_43 = arith.constant 0 : index
    %c8 = arith.constant 8 : index
    %78 = vector.load %arg16[%c0_42, %c0_43, %c8] : memref<1x8x32xf32, #tpu.memory_space<vmem>>, vector<1x8x8xf32>
    tpu.vector_store %arg16[%c0_42, %c0_43, %c8], %77 {strides = array<i32>} : memref<1x8x32xf32, #tpu.memory_space<vmem>>, vector<1x8x8xf32>,
    "tpu.trace_start"() <{level = 10 : i32, message = "bqk,bkd->bqd"}> : () -> ()
    %cst_44 = arith.constant dense<0.000000e+00> : vector<1x8x8xf32>
    %79 = tpu.matmul %77, %64, %cst_44 {dimension_numbers = #tpu.dot_dimension_numbers<[2], [1], [1], [2], [0, 0, 0, 1, 1, 2], [0], [0]>} : vector<1x8x8xf32>, vector<1x8x8xf32>, vector<1x8x8xf32> -> vector<1x8x8xf32>
    "tpu.trace_stop"() : () -> ()
    %80 = vector.shape_cast %79 : vector<1x8x8xf32> to vector<8x8xf32>
    %c8_45 = arith.constant 8 : index
    %c0_46 = arith.constant 0 : index
    %81 = vector.load %arg11[%c8_45, %c0_46] : memref<32x32xf32, #tpu.memory_space<vmem>>, vector<8x32xf32>
    %cst_47 = arith.constant dense<0.000000e+00> : vector<8x32xf32>
    %82 = tpu.matmul %80, %81, %cst_47 {dimension_numbers = #tpu.dot_dimension_numbers<[1], [0], [0], [1], [0, 0, 1, 1], [], []>} : vector<8x8xf32>, vector<8x32xf32>, vector<8x32xf32> -> vector<8x32xf32>
    %83 = arith.addf %61, %82 : vector<8x32xf32>
    %84 = vector.extract_strided_slice %31 {offsets = [0, 0, 16], sizes = [1, 8, 8], strides = [1, 1, 1]} : vector<1x8x32xf32> to vector<1x8x8xf32>
    %85 = vector.extract_strided_slice %32 {offsets = [0, 0, 16], sizes = [1, 8, 8], strides = [1, 1, 1]} : vector<1x8x32xf32> to vector<1x8x8xf32>
    %86 = vector.extract_strided_slice %33 {offsets = [0, 0, 16], sizes = [1, 8, 8], strides = [1, 1, 1]} : vector<1x8x32xf32> to vector<1x8x8xf32>
    "tpu.trace_start"() <{level = 10 : i32, message = "bqd,bkd->bqk"}> : () -> ()
    %cst_48 = arith.constant dense<0.000000e+00> : vector<1x8x8xf32>
    %87 = tpu.matmul %84, %85, %cst_48 {dimension_numbers = #tpu.dot_dimension_numbers<[2], [2], [1], [1], [0, 0, 0, 1, 1, 1], [0], [0]>} : vector<1x8x8xf32>, vector<1x8x8xf32>, vector<1x8x8xf32> -> vector<1x8x8xf32>
    "tpu.trace_stop"() : () -> ()
    %88 = vector.broadcast %34 : vector<1x1x8xf32> to vector<1x8x8xf32>
    %89 = arith.addf %87, %88 : vector<1x8x8xf32>
    %cst_49 = arith.constant dense<0xFF800000> : vector<1x8xf32>
    %90 = vector.multi_reduction <maximumf>, %89, %cst_49 [2] : vector<1x8x8xf32> to vector<1x8xf32>
    %91 = vector.shape_cast %90 : vector<1x8xf32> to vector<1x8x1xf32>
    %92 = vector.broadcast %91 : vector<1x8x1xf32> to vector<1x8x8xf32>
    %93 = arith.subf %89, %92 : vector<1x8x8xf32>
    %94 = math.exp %93 : vector<1x8x8xf32>
    %cst_50 = arith.constant dense<0.000000e+00> : vector<1x8xf32>
    %95 = vector.multi_reduction <add>, %94, %cst_50 [2] : vector<1x8x8xf32> to vector<1x8xf32>
    %96 = vector.shape_cast %95 : vector<1x8xf32> to vector<1x8x1xf32>
    %97 = tpu.reciprocal %96 : vector<1x8x1xf32> -> vector<1x8x1xf32>
    %98 = vector.broadcast %97 : vector<1x8x1xf32> to vector<1x8x8xf32>
    %99 = arith.mulf %94, %98 : vector<1x8x8xf32>
    %c0_51 = arith.constant 0 : index
    %c0_52 = arith.constant 0 : index
    %c16 = arith.constant 16 : index
    %100 = vector.load %arg16[%c0_51, %c0_52, %c16] : memref<1x8x32xf32, #tpu.memory_space<vmem>>, vector<1x8x8xf32>
    tpu.vector_store %arg16[%c0_51, %c0_52, %c16], %99 {strides = array<i32>} : memref<1x8x32xf32, #tpu.memory_space<vmem>>, vector<1x8x8xf32>,
    "tpu.trace_start"() <{level = 10 : i32, message = "bqk,bkd->bqd"}> : () -> ()
    %cst_53 = arith.constant dense<0.000000e+00> : vector<1x8x8xf32>
    %101 = tpu.matmul %99, %86, %cst_53 {dimension_numbers = #tpu.dot_dimension_numbers<[2], [1], [1], [2], [0, 0, 0, 1, 1, 2], [0], [0]>} : vector<1x8x8xf32>, vector<1x8x8xf32>, vector<1x8x8xf32> -> vector<1x8x8xf32>
    "tpu.trace_stop"() : () -> ()
    %102 = vector.shape_cast %101 : vector<1x8x8xf32> to vector<8x8xf32>
    %c16_54 = arith.constant 16 : index
    %c0_55 = arith.constant 0 : index
    %103 = vector.load %arg11[%c16_54, %c0_55] : memref<32x32xf32, #tpu.memory_space<vmem>>, vector<8x32xf32>
    %cst_56 = arith.constant dense<0.000000e+00> : vector<8x32xf32>
    %104 = tpu.matmul %102, %103, %cst_56 {dimension_numbers = #tpu.dot_dimension_numbers<[1], [0], [0], [1], [0, 0, 1, 1], [], []>} : vector<8x8xf32>, vector<8x32xf32>, vector<8x32xf32> -> vector<8x32xf32>
    %105 = arith.addf %83, %104 : vector<8x32xf32>
    %106 = vector.extract_strided_slice %31 {offsets = [0, 0, 24], sizes = [1, 8, 8], strides = [1, 1, 1]} : vector<1x8x32xf32> to vector<1x8x8xf32>
    %107 = vector.extract_strided_slice %32 {offsets = [0, 0, 24], sizes = [1, 8, 8], strides = [1, 1, 1]} : vector<1x8x32xf32> to vector<1x8x8xf32>
    %108 = vector.extract_strided_slice %33 {offsets = [0, 0, 24], sizes = [1, 8, 8], strides = [1, 1, 1]} : vector<1x8x32xf32> to vector<1x8x8xf32>
    "tpu.trace_start"() <{level = 10 : i32, message = "bqd,bkd->bqk"}> : () -> ()
    %cst_57 = arith.constant dense<0.000000e+00> : vector<1x8x8xf32>
    %109 = tpu.matmul %106, %107, %cst_57 {dimension_numbers = #tpu.dot_dimension_numbers<[2], [2], [1], [1], [0, 0, 0, 1, 1, 1], [0], [0]>} : vector<1x8x8xf32>, vector<1x8x8xf32>, vector<1x8x8xf32> -> vector<1x8x8xf32>
    "tpu.trace_stop"() : () -> ()
    %110 = vector.broadcast %34 : vector<1x1x8xf32> to vector<1x8x8xf32>
    %111 = arith.addf %109, %110 : vector<1x8x8xf32>
    %cst_58 = arith.constant dense<0xFF800000> : vector<1x8xf32>
    %112 = vector.multi_reduction <maximumf>, %111, %cst_58 [2] : vector<1x8x8xf32> to vector<1x8xf32>
    %113 = vector.shape_cast %112 : vector<1x8xf32> to vector<1x8x1xf32>
    %114 = vector.broadcast %113 : vector<1x8x1xf32> to vector<1x8x8xf32>
    %115 = arith.subf %111, %114 : vector<1x8x8xf32>
    %116 = math.exp %115 : vector<1x8x8xf32>
    %cst_59 = arith.constant dense<0.000000e+00> : vector<1x8xf32>
    %117 = vector.multi_reduction <add>, %116, %cst_59 [2] : vector<1x8x8xf32> to vector<1x8xf32>
    %118 = vector.shape_cast %117 : vector<1x8xf32> to vector<1x8x1xf32>
    %119 = tpu.reciprocal %118 : vector<1x8x1xf32> -> vector<1x8x1xf32>
    %120 = vector.broadcast %119 : vector<1x8x1xf32> to vector<1x8x8xf32>
    %121 = arith.mulf %116, %120 : vector<1x8x8xf32>
    %c0_60 = arith.constant 0 : index
    %c0_61 = arith.constant 0 : index
    %c24 = arith.constant 24 : index
    %122 = vector.load %arg16[%c0_60, %c0_61, %c24] : memref<1x8x32xf32, #tpu.memory_space<vmem>>, vector<1x8x8xf32>
    tpu.vector_store %arg16[%c0_60, %c0_61, %c24], %121 {strides = array<i32>} : memref<1x8x32xf32, #tpu.memory_space<vmem>>, vector<1x8x8xf32>,
    "tpu.trace_start"() <{level = 10 : i32, message = "bqk,bkd->bqd"}> : () -> ()
    %cst_62 = arith.constant dense<0.000000e+00> : vector<1x8x8xf32>
    %123 = tpu.matmul %121, %108, %cst_62 {dimension_numbers = #tpu.dot_dimension_numbers<[2], [1], [1], [2], [0, 0, 0, 1, 1, 2], [0], [0]>} : vector<1x8x8xf32>, vector<1x8x8xf32>, vector<1x8x8xf32> -> vector<1x8x8xf32>
    "tpu.trace_stop"() : () -> ()
    %124 = vector.shape_cast %123 : vector<1x8x8xf32> to vector<8x8xf32>
    %c24_63 = arith.constant 24 : index
    %c0_64 = arith.constant 0 : index
    %125 = vector.load %arg11[%c24_63, %c0_64] : memref<32x32xf32, #tpu.memory_space<vmem>>, vector<8x32xf32>
    %cst_65 = arith.constant dense<0.000000e+00> : vector<8x32xf32>
    %126 = tpu.matmul %124, %125, %cst_65 {dimension_numbers = #tpu.dot_dimension_numbers<[1], [0], [0], [1], [0, 0, 1, 1], [], []>} : vector<8x8xf32>, vector<8x32xf32>, vector<8x32xf32> -> vector<8x32xf32>
    %127 = arith.addf %105, %126 : vector<8x32xf32>
    %cst_66 = arith.constant dense<0.000000e+00> : vector<8xf32>
    %128 = vector.multi_reduction <add>, %127, %cst_66 [1] : vector<8x32xf32> to vector<8xf32>
    %129 = vector.shape_cast %128 : vector<8xf32> to vector<8x1xf32>
    %cst_67 = arith.constant 3.200000e+01 : f32
    %130 = vector.broadcast %cst_67 : f32 to vector<8x1xf32>
    %131 = arith.divf %129, %130 : vector<8x1xf32>
    %132 = vector.broadcast %131 : vector<8x1xf32> to vector<8x32xf32>
    %133 = arith.subf %127, %132 : vector<8x32xf32>
    %134 = arith.mulf %133, %133 : vector<8x32xf32>
    %cst_68 = arith.constant dense<0.000000e+00> : vector<8xf32>
    %135 = vector.multi_reduction <add>, %134, %cst_68 [1] : vector<8x32xf32> to vector<8xf32>
    %136 = vector.shape_cast %135 : vector<8xf32> to vector<8x1xf32>
    %cst_69 = arith.constant 3.200000e+01 : f32
    %137 = vector.broadcast %cst_69 : f32 to vector<8x1xf32>
    %138 = arith.divf %136, %137 : vector<8x1xf32>
    %139 = vector.broadcast %131 : vector<8x1xf32> to vector<8x32xf32>
    %140 = arith.subf %127, %139 : vector<8x32xf32>
    %cst_70 = arith.constant 9.99999974E-6 : f32
    %141 = vector.broadcast %cst_70 : f32 to vector<8x1xf32>
    %142 = arith.addf %138, %141 : vector<8x1xf32>
    %143 = math.rsqrt %142 : vector<8x1xf32>
    %144 = vector.broadcast %143 : vector<8x1xf32> to vector<8x32xf32>
    %145 = arith.mulf %140, %144 : vector<8x32xf32>
    %c0_71 = arith.constant 0 : index
    %c0_72 = arith.constant 0 : index
    %146 = vector.load %arg13[%c0_71, %c0_72] : memref<1x32xf32, #tpu.memory_space<vmem>>, vector<1x32xf32>
    %147 = vector.shape_cast %146 : vector<1x32xf32> to vector<32xf32>
    %148 = vector.shape_cast %147 : vector<32xf32> to vector<1x32xf32>
    %149 = vector.broadcast %148 : vector<1x32xf32> to vector<8x32xf32>
    %150 = arith.mulf %145, %149 : vector<8x32xf32>
    %c0_73 = arith.constant 0 : index
    %c0_74 = arith.constant 0 : index
    %151 = vector.load %arg14[%c0_73, %c0_74] : memref<1x32xf32, #tpu.memory_space<vmem>>, vector<1x32xf32>
    %152 = vector.shape_cast %151 : vector<1x32xf32> to vector<32xf32>
    %153 = vector.shape_cast %152 : vector<32xf32> to vector<1x32xf32>
    %154 = vector.broadcast %153 : vector<1x32xf32> to vector<8x32xf32>
    %155 = arith.addf %150, %154 : vector<8x32xf32>
    %156 = vector.shape_cast %155 : vector<8x32xf32> to vector<1x8x32xf32>
    %c0_75 = arith.constant 0 : index
    %c0_76 = arith.constant 0 : index
    %c0_77 = arith.constant 0 : index
    %157 = vector.load %arg15[%c0_75, %c0_76, %c0_77] : memref<1x8x32xf32, #tpu.memory_space<vmem>>, vector<1x8x32xf32>
    tpu.vector_store %arg15[%c0_75, %c0_76, %c0_77], %156 {strides = array<i32>} : memref<1x8x32xf32, #tpu.memory_space<vmem>>, vector<1x8x32xf32>,
    return
  }
  func.func @transform_0(%arg0: i32) -> (i32, i32, i32) {
    %c0_i32 = arith.constant 0 : i32
    %c0_i32_0 = arith.constant 0 : i32
    %c0_i32_1 = arith.constant 0 : i32
    return %arg0, %c0_i32, %c0_i32_0 : i32, i32, i32
  }
  func.func @transform_1(%arg0: i32) -> (i32, i32, i32) {
    %c0_i32 = arith.constant 0 : i32
    %c0_i32_0 = arith.constant 0 : i32
    %c0_i32_1 = arith.constant 0 : i32
    return %arg0, %c0_i32, %c0_i32_0 : i32, i32, i32
  }
  func.func @transform_2(%arg0: i32) -> (i32, i32, i32) {
    %c0_i32 = arith.constant 0 : i32
    %c0_i32_0 = arith.constant 0 : i32
    %c0_i32_1 = arith.constant 0 : i32
    return %arg0, %c0_i32, %c0_i32_0 : i32, i32, i32
  }
  func.func @transform_3(%arg0: i32) -> (i32, i32, i32) {
    %c0_i32 = arith.constant 0 : i32
    %c0_i32_0 = arith.constant 0 : i32
    %c0_i32_1 = arith.constant 0 : i32
    return %arg0, %c0_i32, %c0_i32_0 : i32, i32, i32
  }
  func.func @transform_4(%arg0: i32) -> (i32, i32) {
    %c0_i32 = arith.constant 0 : i32
    %c0_i32_0 = arith.constant 0 : i32
    %c0_i32_1 = arith.constant 0 : i32
    return %c0_i32, %c0_i32_0 : i32, i32
  }
  func.func @transform_5(%arg0: i32) -> (i32, i32) {
    %c0_i32 = arith.constant 0 : i32
    %c0_i32_0 = arith.constant 0 : i32
    %c0_i32_1 = arith.constant 0 : i32
    return %c0_i32, %c0_i32_0 : i32, i32
  }
  func.func @transform_6(%arg0: i32) -> (i32, i32) {
    %c0_i32 = arith.constant 0 : i32
    %c0_i32_0 = arith.constant 0 : i32
    %c0_i32_1 = arith.constant 0 : i32
    return %c0_i32, %c0_i32_0 : i32, i32
  }
  func.func @transform_7(%arg0: i32) -> (i32, i32) {
    %c0_i32 = arith.constant 0 : i32
    %c0_i32_0 = arith.constant 0 : i32
    %c0_i32_1 = arith.constant 0 : i32
    return %c0_i32, %c0_i32_0 : i32, i32
  }
  func.func @transform_8(%arg0: i32) -> (i32, i32) {
    %c0_i32 = arith.constant 0 : i32
    %c0_i32_0 = arith.constant 0 : i32
    %c0_i32_1 = arith.constant 0 : i32
    return %c0_i32, %c0_i32_0 : i32, i32
  }
  func.func @transform_9(%arg0: i32) -> (i32, i32) {
    %c0_i32 = arith.constant 0 : i32
    %c0_i32_0 = arith.constant 0 : i32
    %c0_i32_1 = arith.constant 0 : i32
    return %c0_i32, %c0_i32_0 : i32, i32
  }
  func.func @transform_10(%arg0: i32) -> (i32, i32) {
    %c0_i32 = arith.constant 0 : i32
    %c0_i32_0 = arith.constant 0 : i32
    %c0_i32_1 = arith.constant 0 : i32
    return %c0_i32, %c0_i32_0 : i32, i32
  }
  func.func @transform_11(%arg0: i32) -> (i32, i32) {
    %c0_i32 = arith.constant 0 : i32
    %c0_i32_0 = arith.constant 0 : i32
    %c0_i32_1 = arith.constant 0 : i32
    return %c0_i32, %c0_i32_0 : i32, i32
  }
  func.func @transform_12(%arg0: i32) -> (i32, i32) {
    %c0_i32 = arith.constant 0 : i32
    %c0_i32_0 = arith.constant 0 : i32
    %c0_i32_1 = arith.constant 0 : i32
    return %c0_i32, %c0_i32_0 : i32, i32
  }
  func.func @transform_13(%arg0: i32) -> (i32, i32) {
    %c0_i32 = arith.constant 0 : i32
    %c0_i32_0 = arith.constant 0 : i32
    %c0_i32_1 = arith.constant 0 : i32
    return %c0_i32, %c0_i32_0 : i32, i32
  }
  func.func @transform_14(%arg0: i32) -> (i32, i32, i32) {
    %c0_i32 = arith.constant 0 : i32
    %c0_i32_0 = arith.constant 0 : i32
    %c0_i32_1 = arith.constant 0 : i32
    return %arg0, %c0_i32, %c0_i32_0 : i32, i32, i32
  }
  func.func @transform_15(%arg0: i32) -> (i32, i32, i32) {
    %c0_i32 = arith.constant 0 : i32
    %c0_i32_0 = arith.constant 0 : i32
    %c0_i32_1 = arith.constant 0 : i32
    return %arg0, %c0_i32, %c0_i32_0 : i32, i32, i32
  }
}

</mosaic_0001>

<llo_original>
// kernel: multi_head_attention.1
$region0: #{multi_head_attention.1}
  #allocation0 [shape = 'u32[]', space=smem, size = 0x4, offset = 0x4, fixed_abs, tag = 'smem constant byte address 0x4 - core index']
  #allocation1 [shape = 'u32[144,128]{1,0:T(1,128)}', space=vmem, size = 0x12000, scoped, tag = 'internal scratch']
  %s0 = inlined_call_operand.hbm [shape: f32[2,8,32], index: 0, kind: input, shape index: {}]
  %s1 = inlined_call_operand.hbm [shape: f32[2,8,32], index: 1, kind: input, shape index: {}]
  %s2 = inlined_call_operand.hbm [shape: f32[2,8,32], index: 2, kind: input, shape index: {}]
  %s3 = inlined_call_operand.vmem [shape: f32[2,1,8], index: 3, kind: input, shape index: {}]
  %s4 = inlined_call_operand.vmem [shape: f32[32,32], index: 4, kind: input, shape index: {}]
  %s5 = inlined_call_operand.hbm [shape: f32[1,32], index: 5, kind: input, shape index: {}]
  %s6 = inlined_call_operand.hbm [shape: f32[32,32], index: 6, kind: input, shape index: {}]
  %s7 = inlined_call_operand.hbm [shape: f32[1,32], index: 7, kind: input, shape index: {}]
  %s8 = inlined_call_operand.hbm [shape: f32[32,32], index: 8, kind: input, shape index: {}]
  %s9 = inlined_call_operand.hbm [shape: f32[1,32], index: 9, kind: input, shape index: {}]
  %s10 = inlined_call_operand.vmem [shape: f32[32,32], index: 10, kind: input, shape index: {}]
  %s11 = inlined_call_operand.vmem [shape: f32[1,32], index: 11, kind: input, shape index: {}]
  %s12 = inlined_call_operand.vmem [shape: f32[1,32], index: 12, kind: input, shape index: {}]
  %s13 = inlined_call_operand.vmem [shape: f32[1,32], index: 13, kind: input, shape index: {}]
  %s14 = inlined_call_operand.hbm [shape: f32[2,8,32], index: 14, kind: output, shape index: {0}]
  %s15 = inlined_call_operand.vmem [shape: f32[2,8,32], index: 15, kind: output, shape index: {1}]
  %16 = xla_tuple %s14, %s15
  %s17 = sld [smem:[#allocation0]]
  $region129: #{multi_head_attention.1} parent=0
    _
  %s19 = ssub.s32 1, %s17
  %s20 = scalar_select 0, %s19, %s17
  $region1: #{multi_head_attention.1} parent=0
    #allocation2 [shape = 'u8[8192]{0}', space=vmem, size = 0x2000, scoped, tag = 'input window, operand 0']
    #allocation3 [shape = 's32[2]{0}', space=sflag, size = 0x8, scoped, tag = 'scoped memory for multi_head_attention.1']
    #allocation4 [shape = 's32[2]{0}', space=sflag, size = 0x8, scoped, tag = 'scoped memory for multi_head_attention.1']
    #allocation5 [shape = 'u8[8192]{0}', space=vmem, size = 0x2000, scoped, tag = 'input window, operand 1']
    #allocation6 [shape = 's32[2]{0}', space=sflag, size = 0x8, scoped, tag = 'scoped memory for multi_head_attention.1']
    #allocation7 [shape = 'u8[8192]{0}', space=vmem, size = 0x2000, scoped, tag = 'input window, operand 2']
    #allocation8 [shape = 'u8[512]{0}', space=vmem, size = 0x400, scoped, tag = 'input window, operand 5, single buffered']
    #allocation9 [shape = 's32[1]{0}', space=sflag, size = 0x4, scoped, tag = 'scoped memory for multi_head_attention.1']
    #allocation10 [shape = 'u8[16384]{0}', space=vmem, size = 0x4000, scoped, tag = 'input window, operand 6, single buffered']
    #allocation11 [shape = 'u8[512]{0}', space=vmem, size = 0x400, scoped, tag = 'input window, operand 7, single buffered']
    #allocation12 [shape = 's32[1]{0}', space=sflag, size = 0x4, scoped, tag = 'scoped memory for multi_head_attention.1']
    #allocation13 [shape = 'u8[16384]{0}', space=vmem, size = 0x4000, scoped, tag = 'input window, operand 8, single buffered']
    #allocation14 [shape = 'u8[512]{0}', space=vmem, size = 0x400, scoped, tag = 'input window, operand 9, single buffered']
    #allocation15 [shape = 's32[1]{0}', space=sflag, size = 0x4, scoped, tag = 'scoped memory for multi_head_attention.1']
    #allocation16 [shape = 'u8[8192]{0}', space=vmem, size = 0x2000, scoped, tag = 'output window, operand 0']
    %21 = vsyncpa [#allocation3], 0
    %s22 = scalar_lea.sflag [#allocation3], 1
    %23 = vsyncpa %s22, 0
    %24 = vsyncpa [#allocation6], 0
    %s25 = scalar_lea.sflag [#allocation6], 1
    %26 = vsyncpa %s25, 0
    %27 = vsyncpa [#allocation9], 0
    %28 = vsyncpa [#allocation12], 0
    %29 = vsyncpa [#allocation15], 0
    %30 = vsyncpa [#allocation4], 0
    %s31 = scalar_lea.sflag [#allocation4], 1
    %32 = vsyncpa %s31, 0
    loop: start=0, step=1, limit=4
    $region2: #{multi_head_attention.1} parent=1 // loop_pre_header
      _
    $region3: #{multi_head_attention.1} parent=1 // loop_header
      %s34 = sphi 0, %s38
      %p35 = scmp.ge.s32.totalorder %s34, 4
      %s44 = sphi 0, %s46
      %s47 = sphi 0, %s44
      %s48 = sphi 0, %s47
      %s64 = sphi 0, %s48
      %s70 = sphi 0, %s72
      %s73 = sphi 0, %s70
      %s74 = sphi 0, %s73
      %s90 = sphi 0, %s74
      %s96 = sphi 0, %s98
      %s99 = sphi 0, %s96
      %s100 = sphi 0, %s99
      %s116 = sphi 0, %s100
      %s122 = sphi 0, %s124
      %s125 = sphi 0, %s122
      %s126 = sphi 0, %s125
      %s142 = sphi 0, %s126
      %s146 = sphi 0, %s146
      %s148 = sphi 0, %s146
      %s149 = sphi 0, %s148
      %s163 = sphi 0, %s149
      %s167 = sphi 0, %s167
      %s169 = sphi 0, %s167
      %s170 = sphi 0, %s169
      %s184 = sphi 0, %s170
      %s188 = sphi 0, %s188
      %s190 = sphi 0, %s188
      %s191 = sphi 0, %s190
      %s205 = sphi 0, %s191
      %s209 = sphi 0, %s209
      %s211 = sphi 0, %s209
      %s212 = sphi 0, %s211
      %s226 = sphi 0, %s212
      %s230 = sphi 0, %s230
      %s232 = sphi 0, %s230
      %s233 = sphi 0, %s232
      %s247 = sphi 0, %s233
      %s251 = sphi 0, %s251
      %s253 = sphi 0, %s251
      %s254 = sphi 0, %s253
      %s268 = sphi 0, %s254
      %s272 = sphi 0, %s272
      %s274 = sphi 0, %s272
      %s275 = sphi 0, %s274
      %s289 = sphi 0, %s275
      %s293 = sphi 0, %s293
      %s295 = sphi 0, %s293
      %s296 = sphi 0, %s295
      %s310 = sphi 0, %s296
      %s314 = sphi 0, %s314
      %s316 = sphi 0, %s314
      %s317 = sphi 0, %s316
      %s331 = sphi 0, %s317
      %s335 = sphi 0, %s335
      %s337 = sphi 0, %s335
      %s338 = sphi 0, %s337
      %s352 = sphi 0, %s338
      %s358 = sphi 0, %s360
      %s361 = sphi 0, %s358
      %s362 = sphi 0, %s361
      %s378 = sphi 0, %s362
      %s384 = sphi 0, %s386
      %s387 = sphi 0, %s384
      %s388 = sphi 0, %s387
      %s404 = sphi 0, %s388
    $region4: #{multi_head_attention.1} parent=1 // loop_header_branch
      %37 = sbr.rel (%p35) target = $region8
    $region5: #{multi_head_attention.1} parent=1 // loop_body
      %s39 = ssub.s32 %s34, 1
      %s40 = ssub.s32 %s34, 2
      %s41 = sadd.s32 %s34, 1
      %s42 = ssub.s32 %s34, %s41
      %p43 = scmp.eq.s32.totalorder %s42, 0
      %s45 = sadd.s32 %s44, 1
      %s46 = scalar_select %p43, %s44, %s45
      %p49 = pneg %p43
      %p50 = scmp.eq.s32.totalorder %s34, 1
      %p51 = por %p49, %p50
      %p52 = scmp.ne.s32.totalorder %s44, %s47
      %p53 = scmp.eq.s32.totalorder %s34, 0
      %p54 = por %p52, %p53
      %p55 = scmp.ne.s32.totalorder %s44, %s47
      %p56 = scmp.eq.s32.totalorder %s39, 1
      %p57 = por %p55, %p56
      %p58 = scmp.ne.s32.totalorder %s47, %s48
      %p59 = scmp.eq.s32.totalorder %s39, 0
      %p60 = por %p58, %p59
      %p61 = scmp.ne.s32.totalorder %s47, %s48
      %p62 = scmp.eq.s32.totalorder %s40, 1
      %p63 = por %p61, %p62
      %p65 = scmp.ne.s32.totalorder %s48, %s64
      %p66 = scmp.eq.s32.totalorder %s40, 0
      %p67 = por %p65, %p66
      %s68 = ssub.s32 %s34, %s41
      %p69 = scmp.eq.s32.totalorder %s68, 0
      %s71 = sadd.s32 %s70, 1
      %s72 = scalar_select %p69, %s70, %s71
      %p75 = pneg %p69
      %p76 = scmp.eq.s32.totalorder %s34, 1
      %p77 = por %p75, %p76
      %p78 = scmp.ne.s32.totalorder %s70, %s73
      %p79 = scmp.eq.s32.totalorder %s34, 0
      %p80 = por %p78, %p79
      %p81 = scmp.ne.s32.totalorder %s70, %s73
      %p82 = scmp.eq.s32.totalorder %s39, 1
      %p83 = por %p81, %p82
      %p84 = scmp.ne.s32.totalorder %s73, %s74
      %p85 = scmp.eq.s32.totalorder %s39, 0
      %p86 = por %p84, %p85
      %p87 = scmp.ne.s32.totalorder %s73, %s74
      %p88 = scmp.eq.s32.totalorder %s40, 1
      %p89 = por %p87, %p88
      %p91 = scmp.ne.s32.totalorder %s74, %s90
      %p92 = scmp.eq.s32.totalorder %s40, 0
      %p93 = por %p91, %p92
      %s94 = ssub.s32 %s34, %s41
      %p95 = scmp.eq.s32.totalorder %s94, 0
      %s97 = sadd.s32 %s96, 1
      %s98 = scalar_select %p95, %s96, %s97
      %p101 = pneg %p95
      %p102 = scmp.eq.s32.totalorder %s34, 1
      %p103 = por %p101, %p102
      %p104 = scmp.ne.s32.totalorder %s96, %s99
      %p105 = scmp.eq.s32.totalorder %s34, 0
      %p106 = por %p104, %p105
      %p107 = scmp.ne.s32.totalorder %s96, %s99
      %p108 = scmp.eq.s32.totalorder %s39, 1
      %p109 = por %p107, %p108
      %p110 = scmp.ne.s32.totalorder %s99, %s100
      %p111 = scmp.eq.s32.totalorder %s39, 0
      %p112 = por %p110, %p111
      %p113 = scmp.ne.s32.totalorder %s99, %s100
      %p114 = scmp.eq.s32.totalorder %s40, 1
      %p115 = por %p113, %p114
      %p117 = scmp.ne.s32.totalorder %s100, %s116
      %p118 = scmp.eq.s32.totalorder %s40, 0
      %p119 = por %p117, %p118
      %s120 = ssub.s32 %s34, %s41
      %p121 = scmp.eq.s32.totalorder %s120, 0
      %s123 = sadd.s32 %s122, 1
      %s124 = scalar_select %p121, %s122, %s123
      %p127 = pneg %p121
      %p128 = scmp.eq.s32.totalorder %s34, 1
      %p129 = por %p127, %p128
      %p130 = scmp.ne.s32.totalorder %s122, %s125
      %p131 = scmp.eq.s32.totalorder %s34, 0
      %p132 = por %p130, %p131
      %p133 = scmp.ne.s32.totalorder %s122, %s125
      %p134 = scmp.eq.s32.totalorder %s39, 1
      %p135 = por %p133, %p134
      %p136 = scmp.ne.s32.totalorder %s125, %s126
      %p137 = scmp.eq.s32.totalorder %s39, 0
      %p138 = por %p136, %p137
      %p139 = scmp.ne.s32.totalorder %s125, %s126
      %p140 = scmp.eq.s32.totalorder %s40, 1
      %p141 = por %p139, %p140
      %p143 = scmp.ne.s32.totalorder %s126, %s142
      %p144 = scmp.eq.s32.totalorder %s40, 0
      %p145 = por %p143, %p144
      %s147 = sadd.s32 %s146, 1
      %p150 = scmp.eq.s32.totalorder %s34, 1
      %p151 = scmp.ne.s32.totalorder %s146, %s148
      %p152 = scmp.eq.s32.totalorder %s34, 0
      %p153 = por %p151, %p152
      %p154 = scmp.ne.s32.totalorder %s146, %s148
      %p155 = scmp.eq.s32.totalorder %s39, 1
      %p156 = por %p154, %p155
      %p157 = scmp.ne.s32.totalorder %s148, %s149
      %p158 = scmp.eq.s32.totalorder %s39, 0
      %p159 = por %p157, %p158
      %p160 = scmp.ne.s32.totalorder %s148, %s149
      %p161 = scmp.eq.s32.totalorder %s40, 1
      %p162 = por %p160, %p161
      %p164 = scmp.ne.s32.totalorder %s149, %s163
      %p165 = scmp.eq.s32.totalorder %s40, 0
      %p166 = por %p164, %p165
      %s168 = sadd.s32 %s167, 1
      %p171 = scmp.eq.s32.totalorder %s34, 1
      %p172 = scmp.ne.s32.totalorder %s167, %s169
      %p173 = scmp.eq.s32.totalorder %s34, 0
      %p174 = por %p172, %p173
      %p175 = scmp.ne.s32.totalorder %s167, %s169
      %p176 = scmp.eq.s32.totalorder %s39, 1
      %p177 = por %p175, %p176
      %p178 = scmp.ne.s32.totalorder %s169, %s170
      %p179 = scmp.eq.s32.totalorder %s39, 0
      %p180 = por %p178, %p179
      %p181 = scmp.ne.s32.totalorder %s169, %s170
      %p182 = scmp.eq.s32.totalorder %s40, 1
      %p183 = por %p181, %p182
      %p185 = scmp.ne.s32.totalorder %s170, %s184
      %p186 = scmp.eq.s32.totalorder %s40, 0
      %p187 = por %p185, %p186
      %s189 = sadd.s32 %s188, 1
      %p192 = scmp.eq.s32.totalorder %s34, 1
      %p193 = scmp.ne.s32.totalorder %s188, %s190
      %p194 = scmp.eq.s32.totalorder %s34, 0
      %p195 = por %p193, %p194
      %p196 = scmp.ne.s32.totalorder %s188, %s190
      %p197 = scmp.eq.s32.totalorder %s39, 1
      %p198 = por %p196, %p197
      %p199 = scmp.ne.s32.totalorder %s190, %s191
      %p200 = scmp.eq.s32.totalorder %s39, 0
      %p201 = por %p199, %p200
      %p202 = scmp.ne.s32.totalorder %s190, %s191
      %p203 = scmp.eq.s32.totalorder %s40, 1
      %p204 = por %p202, %p203
      %p206 = scmp.ne.s32.totalorder %s191, %s205
      %p207 = scmp.eq.s32.totalorder %s40, 0
      %p208 = por %p206, %p207
      %s210 = sadd.s32 %s209, 1
      %p213 = scmp.eq.s32.totalorder %s34, 1
      %p214 = scmp.ne.s32.totalorder %s209, %s211
      %p215 = scmp.eq.s32.totalorder %s34, 0
      %p216 = por %p214, %p215
      %p217 = scmp.ne.s32.totalorder %s209, %s211
      %p218 = scmp.eq.s32.totalorder %s39, 1
      %p219 = por %p217, %p218
      %p220 = scmp.ne.s32.totalorder %s211, %s212
      %p221 = scmp.eq.s32.totalorder %s39, 0
      %p222 = por %p220, %p221
      %p223 = scmp.ne.s32.totalorder %s211, %s212
      %p224 = scmp.eq.s32.totalorder %s40, 1
      %p225 = por %p223, %p224
      %p227 = scmp.ne.s32.totalorder %s212, %s226
      %p228 = scmp.eq.s32.totalorder %s40, 0
      %p229 = por %p227, %p228
      %s231 = sadd.s32 %s230, 1
      %p234 = scmp.eq.s32.totalorder %s34, 1
      %p235 = scmp.ne.s32.totalorder %s230, %s232
      %p236 = scmp.eq.s32.totalorder %s34, 0
      %p237 = por %p235, %p236
      %p238 = scmp.ne.s32.totalorder %s230, %s232
      %p239 = scmp.eq.s32.totalorder %s39, 1
      %p240 = por %p238, %p239
      %p241 = scmp.ne.s32.totalorder %s232, %s233
      %p242 = scmp.eq.s32.totalorder %s39, 0
      %p243 = por %p241, %p242
      %p244 = scmp.ne.s32.totalorder %s232, %s233
      %p245 = scmp.eq.s32.totalorder %s40, 1
      %p246 = por %p244, %p245
      %p248 = scmp.ne.s32.totalorder %s233, %s247
      %p249 = scmp.eq.s32.totalorder %s40, 0
      %p250 = por %p248, %p249
      %s252 = sadd.s32 %s251, 1
      %p255 = scmp.eq.s32.totalorder %s34, 1
      %p256 = scmp.ne.s32.totalorder %s251, %s253
      %p257 = scmp.eq.s32.totalorder %s34, 0
      %p258 = por %p256, %p257
      %p259 = scmp.ne.s32.totalorder %s251, %s253
      %p260 = scmp.eq.s32.totalorder %s39, 1
      %p261 = por %p259, %p260
      %p262 = scmp.ne.s32.totalorder %s253, %s254
      %p263 = scmp.eq.s32.totalorder %s39, 0
      %p264 = por %p262, %p263
      %p265 = scmp.ne.s32.totalorder %s253, %s254
      %p266 = scmp.eq.s32.totalorder %s40, 1
      %p267 = por %p265, %p266
      %p269 = scmp.ne.s32.totalorder %s254, %s268
      %p270 = scmp.eq.s32.totalorder %s40, 0
      %p271 = por %p269, %p270
      %s273 = sadd.s32 %s272, 1
      %p276 = scmp.eq.s32.totalorder %s34, 1
      %p277 = scmp.ne.s32.totalorder %s272, %s274
      %p278 = scmp.eq.s32.totalorder %s34, 0
      %p279 = por %p277, %p278
      %p280 = scmp.ne.s32.totalorder %s272, %s274
      %p281 = scmp.eq.s32.totalorder %s39, 1
      %p282 = por %p280, %p281
      %p283 = scmp.ne.s32.totalorder %s274, %s275
      %p284 = scmp.eq.s32.totalorder %s39, 0
      %p285 = por %p283, %p284
      %p286 = scmp.ne.s32.totalorder %s274, %s275
      %p287 = scmp.eq.s32.totalorder %s40, 1
      %p288 = por %p286, %p287
      %p290 = scmp.ne.s32.totalorder %s275, %s289
      %p291 = scmp.eq.s32.totalorder %s40, 0
      %p292 = por %p290, %p291
      %s294 = sadd.s32 %s293, 1
      %p297 = scmp.eq.s32.totalorder %s34, 1
      %p298 = scmp.ne.s32.totalorder %s293, %s295
      %p299 = scmp.eq.s32.totalorder %s34, 0
      %p300 = por %p298, %p299
      %p301 = scmp.ne.s32.totalorder %s293, %s295
      %p302 = scmp.eq.s32.totalorder %s39, 1
      %p303 = por %p301, %p302
      %p304 = scmp.ne.s32.totalorder %s295, %s296
      %p305 = scmp.eq.s32.totalorder %s39, 0
      %p306 = por %p304, %p305
      %p307 = scmp.ne.s32.totalorder %s295, %s296
      %p308 = scmp.eq.s32.totalorder %s40, 1
      %p309 = por %p307, %p308
      %p311 = scmp.ne.s32.totalorder %s296, %s310
      %p312 = scmp.eq.s32.totalorder %s40, 0
      %p313 = por %p311, %p312
      %s315 = sadd.s32 %s314, 1
      %p318 = scmp.eq.s32.totalorder %s34, 1
      %p319 = scmp.ne.s32.totalorder %s314, %s316
      %p320 = scmp.eq.s32.totalorder %s34, 0
      %p321 = por %p319, %p320
      %p322 = scmp.ne.s32.totalorder %s314, %s316
      %p323 = scmp.eq.s32.totalorder %s39, 1
      %p324 = por %p322, %p323
      %p325 = scmp.ne.s32.totalorder %s316, %s317
      %p326 = scmp.eq.s32.totalorder %s39, 0
      %p327 = por %p325, %p326
      %p328 = scmp.ne.s32.totalorder %s316, %s317
      %p329 = scmp.eq.s32.totalorder %s40, 1
      %p330 = por %p328, %p329
      %p332 = scmp.ne.s32.totalorder %s317, %s331
      %p333 = scmp.eq.s32.totalorder %s40, 0
      %p334 = por %p332, %p333
      %s336 = sadd.s32 %s335, 1
      %p339 = scmp.eq.s32.totalorder %s34, 1
      %p340 = scmp.ne.s32.totalorder %s335, %s337
      %p341 = scmp.eq.s32.totalorder %s34, 0
      %p342 = por %p340, %p341
      %p343 = scmp.ne.s32.totalorder %s335, %s337
      %p344 = scmp.eq.s32.totalorder %s39, 1
      %p345 = por %p343, %p344
      %p346 = scmp.ne.s32.totalorder %s337, %s338
      %p347 = scmp.eq.s32.totalorder %s39, 0
      %p348 = por %p346, %p347
      %p349 = scmp.ne.s32.totalorder %s337, %s338
      %p350 = scmp.eq.s32.totalorder %s40, 1
      %p351 = por %p349, %p350
      %p353 = scmp.ne.s32.totalorder %s338, %s352
      %p354 = scmp.eq.s32.totalorder %s40, 0
      %p355 = por %p353, %p354
      %s356 = ssub.s32 %s34, %s41
      %p357 = scmp.eq.s32.totalorder %s356, 0
      %s359 = sadd.s32 %s358, 1
      %s360 = scalar_select %p357, %s358, %s359
      %p363 = pneg %p357
      %p364 = scmp.eq.s32.totalorder %s34, 1
      %p365 = por %p363, %p364
      %p366 = scmp.ne.s32.totalorder %s358, %s361
      %p367 = scmp.eq.s32.totalorder %s34, 0
      %p368 = por %p366, %p367
      %p369 = scmp.ne.s32.totalorder %s358, %s361
      %p370 = scmp.eq.s32.totalorder %s39, 1
      %p371 = por %p369, %p370
      %p372 = scmp.ne.s32.totalorder %s361, %s362
      %p373 = scmp.eq.s32.totalorder %s39, 0
      %p374 = por %p372, %p373
      %p375 = scmp.ne.s32.totalorder %s361, %s362
      %p376 = scmp.eq.s32.totalorder %s40, 1
      %p377 = por %p375, %p376
      %p379 = scmp.ne.s32.totalorder %s362, %s378
      %p380 = scmp.eq.s32.totalorder %s40, 0
      %p381 = por %p379, %p380
      %s382 = ssub.s32 %s34, %s41
      %p383 = scmp.eq.s32.totalorder %s382, 0
      %s385 = sadd.s32 %s384, 1
      %s386 = scalar_select %p383, %s384, %s385
      %p389 = pneg %p383
      %p390 = scmp.eq.s32.totalorder %s34, 1
      %p391 = por %p389, %p390
      %p392 = scmp.ne.s32.totalorder %s384, %s387
      %p393 = scmp.eq.s32.totalorder %s34, 0
      %p394 = por %p392, %p393
      %p395 = scmp.ne.s32.totalorder %s384, %s387
      %p396 = scmp.eq.s32.totalorder %s39, 1
      %p397 = por %p395, %p396
      %p398 = scmp.ne.s32.totalorder %s387, %s388
      %p399 = scmp.eq.s32.totalorder %s39, 0
      %p400 = por %p398, %p399
      %p401 = scmp.ne.s32.totalorder %s387, %s388
      %p402 = scmp.eq.s32.totalorder %s40, 1
      %p403 = por %p401, %p402
      %p405 = scmp.ne.s32.totalorder %s388, %s404
      %p406 = scmp.eq.s32.totalorder %s40, 0
      %p407 = por %p405, %p406
      %p408 = scmp.le.s32.totalorder 1, %s34
      %p409 = scmp.lt.s32.totalorder %s34, 3
      %p410 = pnand %p408, %p409
      %p411 = pneg %p410
      // Predicated region
      $region9: #{multi_head_attention.1} parent=5 // pred_check
        _
      $region10: #{multi_head_attention.1} parent=5 // pred_check_branch
        %413 = sbr.rel (%p410) target = $region12
      $region11: #{multi_head_attention.1} parent=5 // pred_region
        %s414 = ssub.s32 %s34, 1
        // Predicated region
        $region13: #{multi_head_attention.1} parent=11 // pred_check
          %p415 = pneg %p159
        $region14: #{multi_head_attention.1} parent=11 // pred_check_branch
          %417 = sbr.rel (%p415) target = $region16
        $region15: #{multi_head_attention.1} parent=11 // pred_region
          _
        $region16: #{multi_head_attention.1} parent=11 // pred_fallthru
          _
        // Predicated region
        $region17: #{multi_head_attention.1} parent=11 // pred_check
          %p418 = pneg %p180
        $region18: #{multi_head_attention.1} parent=11 // pred_check_branch
          %420 = sbr.rel (%p418) target = $region20
        $region19: #{multi_head_attention.1} parent=11 // pred_region
          %s422 = ssub.s32 16, 16
          %423 = vsyncadd [#allocation9], %s422
          %s425 = sshll.u32 [#allocation8], 4
          %s426 = int_to_ptr.vmem [resolvable:$true] %s425
          %428 = dma.hbm_to_vmem [thread:$0]  %s5, 16, %s426, [#allocation9]
        $region20: #{multi_head_attention.1} parent=11 // pred_fallthru
          _
        // Predicated region
        $region21: #{multi_head_attention.1} parent=11 // pred_check
          %p429 = pneg %p201
        $region22: #{multi_head_attention.1} parent=11 // pred_check_branch
          %431 = sbr.rel (%p429) target = $region24
        $region23: #{multi_head_attention.1} parent=11 // pred_region
          %s433 = ssub.s32 512, 512
          %434 = vsyncadd [#allocation9], %s433
          %s435 = sshll.u32 [#allocation10], 4
          %s436 = int_to_ptr.vmem [resolvable:$true] %s435
          %441 = dma.hbm_to_vmem [thread:$0]  %s6, 512, %s436, [#allocation9], 128, 128, 8
        $region24: #{multi_head_attention.1} parent=11 // pred_fallthru
          _
        // Predicated region
        $region25: #{multi_head_attention.1} parent=11 // pred_check
          %p442 = pneg %p222
        $region26: #{multi_head_attention.1} parent=11 // pred_check_branch
          %444 = sbr.rel (%p442) target = $region28
        $region27: #{multi_head_attention.1} parent=11 // pred_region
          %s446 = ssub.s32 16, 16
          %447 = vsyncadd [#allocation12], %s446
          %s449 = sshll.u32 [#allocation11], 4
          %s450 = int_to_ptr.vmem [resolvable:$true] %s449
          %452 = dma.hbm_to_vmem [thread:$0]  %s7, 16, %s450, [#allocation12]
        $region28: #{multi_head_attention.1} parent=11 // pred_fallthru
          _
        // Predicated region
        $region29: #{multi_head_attention.1} parent=11 // pred_check
          %p453 = pneg %p243
        $region30: #{multi_head_attention.1} parent=11 // pred_check_branch
          %455 = sbr.rel (%p453) target = $region32
        $region31: #{multi_head_attention.1} parent=11 // pred_region
          %s457 = ssub.s32 512, 512
          %458 = vsyncadd [#allocation12], %s457
          %s459 = sshll.u32 [#allocation13], 4
          %s460 = int_to_ptr.vmem [resolvable:$true] %s459
          %465 = dma.hbm_to_vmem [thread:$0]  %s8, 512, %s460, [#allocation12], 128, 128, 8
        $region32: #{multi_head_attention.1} parent=11 // pred_fallthru
          _
        // Predicated region
        $region33: #{multi_head_attention.1} parent=11 // pred_check
          %p466 = pneg %p264
        $region34: #{multi_head_attention.1} parent=11 // pred_check_branch
          %468 = sbr.rel (%p466) target = $region36
        $region35: #{multi_head_attention.1} parent=11 // pred_region
          %s470 = ssub.s32 16, 16
          %471 = vsyncadd [#allocation15], %s470
          %s473 = sshll.u32 [#allocation14], 4
          %s474 = int_to_ptr.vmem [resolvable:$true] %s473
          %476 = dma.hbm_to_vmem [thread:$0]  %s9, 16, %s474, [#allocation15]
        $region36: #{multi_head_attention.1} parent=11 // pred_fallthru
          _
        // Predicated region
        $region37: #{multi_head_attention.1} parent=11 // pred_check
          %p477 = pneg %p285
        $region38: #{multi_head_attention.1} parent=11 // pred_check_branch
          %479 = sbr.rel (%p477) target = $region40
        $region39: #{multi_head_attention.1} parent=11 // pred_region
          _
        $region40: #{multi_head_attention.1} parent=11 // pred_fallthru
          _
        // Predicated region
        $region41: #{multi_head_attention.1} parent=11 // pred_check
          %p480 = pneg %p306
        $region42: #{multi_head_attention.1} parent=11 // pred_check_branch
          %482 = sbr.rel (%p480) target = $region44
        $region43: #{multi_head_attention.1} parent=11 // pred_region
          _
        $region44: #{multi_head_attention.1} parent=11 // pred_fallthru
          _
        // Predicated region
        $region45: #{multi_head_attention.1} parent=11 // pred_check
          %p483 = pneg %p327
        $region46: #{multi_head_attention.1} parent=11 // pred_check_branch
          %485 = sbr.rel (%p483) target = $region48
        $region47: #{multi_head_attention.1} parent=11 // pred_region
          _
        $region48: #{multi_head_attention.1} parent=11 // pred_fallthru
          _
        // Predicated region
        $region49: #{multi_head_attention.1} parent=11 // pred_check
          %p486 = pneg %p348
        $region50: #{multi_head_attention.1} parent=11 // pred_check_branch
          %488 = sbr.rel (%p486) target = $region52
        $region51: #{multi_head_attention.1} parent=11 // pred_region
          _
        $region52: #{multi_head_attention.1} parent=11 // pred_fallthru
          _
      $region12: #{multi_head_attention.1} parent=5 // pred_fallthru
        _
      %p489 = scmp.lt.s32.totalorder %s34, 2
      // Predicated region
      $region53: #{multi_head_attention.1} parent=5 // pred_check
        %p490 = pneg %p489
      $region54: #{multi_head_attention.1} parent=5 // pred_check_branch
        %492 = sbr.rel (%p490) target = $region56
      $region55: #{multi_head_attention.1} parent=5 // pred_region
        // Predicated region
        $region57: #{multi_head_attention.1} parent=55 // pred_check
          %p493 = pneg %p54
        $region58: #{multi_head_attention.1} parent=55 // pred_check_branch
          %495 = sbr.rel (%p493) target = $region60
        $region59: #{multi_head_attention.1} parent=55 // pred_region
          %s496 = sand.u32 %s44, 1
          %s497 = scalar_lea.sflag [#allocation3], %s496
          %s498 = sand.u32 %s44, 1
          %s499 = smul.addr %s498, 8
          %s500 = scalar_lea.vmem [#allocation2], %s499
          %s502 = ssub.s32 128, 128
          %503 = vsyncadd %s497, %s502
          %s504 = smul.addr %s34, 128
          %s505 = scalar_lea.hbm %s0, %s504
          %s507 = sshll.u32 %s500, 4
          %s508 = int_to_ptr.vmem [resolvable:$true] %s507
          %510 = dma.hbm_to_vmem [thread:$0]  %s505, 128, %s508, %s497
        $region60: #{multi_head_attention.1} parent=55 // pred_fallthru
          _
        // Predicated region
        $region61: #{multi_head_attention.1} parent=55 // pred_check
          %p511 = pneg %p80
        $region62: #{multi_head_attention.1} parent=55 // pred_check_branch
          %513 = sbr.rel (%p511) target = $region64
        $region63: #{multi_head_attention.1} parent=55 // pred_region
          %s514 = sand.u32 %s34, 1
          %s515 = scalar_lea.sflag [#allocation6], %s514
          %s516 = sand.u32 %s70, 1
          %s517 = smul.addr %s516, 8
          %s518 = scalar_lea.vmem [#allocation5], %s517
          %s520 = ssub.s32 128, 128
          %521 = vsyncadd %s515, %s520
          %s522 = smul.addr %s34, 128
          %s523 = scalar_lea.hbm %s1, %s522
          %s525 = sshll.u32 %s518, 4
          %s526 = int_to_ptr.vmem [resolvable:$true] %s525
          %528 = dma.hbm_to_vmem [thread:$0]  %s523, 128, %s526, %s515
        $region64: #{multi_head_attention.1} parent=55 // pred_fallthru
          _
        // Predicated region
        $region65: #{multi_head_attention.1} parent=55 // pred_check
          %p529 = pneg %p106
        $region66: #{multi_head_attention.1} parent=55 // pred_check_branch
          %531 = sbr.rel (%p529) target = $region68
        $region67: #{multi_head_attention.1} parent=55 // pred_region
          %s532 = sand.u32 %s34, 1
          %s533 = scalar_lea.sflag [#allocation6], %s532
          %s534 = sand.u32 %s96, 1
          %s535 = smul.addr %s534, 8
          %s536 = scalar_lea.vmem [#allocation7], %s535
          %s538 = ssub.s32 128, 128
          %539 = vsyncadd %s533, %s538
          %s540 = smul.addr %s34, 128
          %s541 = scalar_lea.hbm %s2, %s540
          %s543 = sshll.u32 %s536, 4
          %s544 = int_to_ptr.vmem [resolvable:$true] %s543
          %546 = dma.hbm_to_vmem [thread:$0]  %s541, 128, %s544, %s533
        $region68: #{multi_head_attention.1} parent=55 // pred_fallthru
          _
        // Predicated region
        $region69: #{multi_head_attention.1} parent=55 // pred_check
          %p547 = pneg %p132
        $region70: #{multi_head_attention.1} parent=55 // pred_check_branch
          %549 = sbr.rel (%p547) target = $region72
        $region71: #{multi_head_attention.1} parent=55 // pred_region
          %p550 = scmp.lt.s32.totalorder %s34, 1
          %s551 = scalar_select %p550, %s34, 1
          %s552 = scalar_lea.vmem %s3, %s551
        $region72: #{multi_head_attention.1} parent=55 // pred_fallthru
          _
      $region56: #{multi_head_attention.1} parent=5 // pred_fallthru
        _
      %p553 = scmp.le.s32.totalorder 1, %s34
      %p554 = scmp.lt.s32.totalorder %s34, 3
      %p555 = pnand %p553, %p554
      %p556 = pneg %p555
      // Predicated region
      $region73: #{multi_head_attention.1} parent=5 // pred_check
        _
      $region74: #{multi_head_attention.1} parent=5 // pred_check_branch
        %558 = sbr.rel (%p555) target = $region76
      $region75: #{multi_head_attention.1} parent=5 // pred_region
        %s559 = ssub.s32 %s34, 1
        %s560 = sand.u32 %s47, 1
        %s561 = scalar_lea.sflag [#allocation3], %s560
        %s562 = sand.u32 %s47, 1
        %s563 = smul.addr %s562, 8
        %s564 = scalar_lea.vmem [#allocation2], %s563
        // Predicated region
        $region77: #{multi_head_attention.1} parent=75 // pred_check
          %p565 = pneg %p60
        $region78: #{multi_head_attention.1} parent=75 // pred_check_branch
          %567 = sbr.rel (%p565) target = $region80
        $region79: #{multi_head_attention.1} parent=75 // pred_region
          %568 = dma.done %s561, 128
        $region80: #{multi_head_attention.1} parent=75 // pred_fallthru
          _
        %s569 = sand.u32 %s39, 1
        %s570 = scalar_lea.sflag [#allocation6], %s569
        %s571 = sand.u32 %s73, 1
        %s572 = smul.addr %s571, 8
        %s573 = scalar_lea.vmem [#allocation5], %s572
        // Predicated region
        $region81: #{multi_head_attention.1} parent=75 // pred_check
          %p574 = pneg %p86
        $region82: #{multi_head_attention.1} parent=75 // pred_check_branch
          %576 = sbr.rel (%p574) target = $region84
        $region83: #{multi_head_attention.1} parent=75 // pred_region
          %577 = dma.done %s570, 128
        $region84: #{multi_head_attention.1} parent=75 // pred_fallthru
          _
        %s578 = sand.u32 %s39, 1
        %s579 = scalar_lea.sflag [#allocation6], %s578
        %s580 = sand.u32 %s99, 1
        %s581 = smul.addr %s580, 8
        %s582 = scalar_lea.vmem [#allocation7], %s581
        // Predicated region
        $region85: #{multi_head_attention.1} parent=75 // pred_check
          %p583 = pneg %p112
        $region86: #{multi_head_attention.1} parent=75 // pred_check_branch
          %585 = sbr.rel (%p583) target = $region88
        $region87: #{multi_head_attention.1} parent=75 // pred_region
          %586 = dma.done %s579, 128
        $region88: #{multi_head_attention.1} parent=75 // pred_fallthru
          _
        // Predicated region
        $region89: #{multi_head_attention.1} parent=75 // pred_check
          %p587 = pneg %p180
        $region90: #{multi_head_attention.1} parent=75 // pred_check_branch
          %589 = sbr.rel (%p587) target = $region92
        $region91: #{multi_head_attention.1} parent=75 // pred_region
          %590 = dma.done [#allocation9], 16
        $region92: #{multi_head_attention.1} parent=75 // pred_fallthru
          _
        // Predicated region
        $region93: #{multi_head_attention.1} parent=75 // pred_check
          %p591 = pneg %p201
        $region94: #{multi_head_attention.1} parent=75 // pred_check_branch
          %593 = sbr.rel (%p591) target = $region96
        $region95: #{multi_head_attention.1} parent=75 // pred_region
          %594 = dma.done [#allocation9], 512
        $region96: #{multi_head_attention.1} parent=75 // pred_fallthru
          _
        // Predicated region
        $region97: #{multi_head_attention.1} parent=75 // pred_check
          %p595 = pneg %p222
        $region98: #{multi_head_attention.1} parent=75 // pred_check_branch
          %597 = sbr.rel (%p595) target = $region100
        $region99: #{multi_head_attention.1} parent=75 // pred_region
          %598 = dma.done [#allocation12], 16
        $region100: #{multi_head_attention.1} parent=75 // pred_fallthru
          _
        // Predicated region
        $region101: #{multi_head_attention.1} parent=75 // pred_check
          %p599 = pneg %p243
        $region102: #{multi_head_attention.1} parent=75 // pred_check_branch
          %601 = sbr.rel (%p599) target = $region104
        $region103: #{multi_head_attention.1} parent=75 // pred_region
          %602 = dma.done [#allocation12], 512
        $region104: #{multi_head_attention.1} parent=75 // pred_fallthru
          _
        // Predicated region
        $region105: #{multi_head_attention.1} parent=75 // pred_check
          %p603 = pneg %p264
        $region106: #{multi_head_attention.1} parent=75 // pred_check_branch
          %605 = sbr.rel (%p603) target = $region108
        $region107: #{multi_head_attention.1} parent=75 // pred_region
          %606 = dma.done [#allocation15], 16
        $region108: #{multi_head_attention.1} parent=75 // pred_fallthru
          _
        %s607 = sand.u32 %s47, 1
        %s608 = scalar_lea.sflag [#allocation3], %s607
        %s609 = sand.u32 %s47, 1
        %s610 = smul.addr %s609, 8
        %s611 = scalar_lea.vmem [#allocation2], %s610
        %p612 = pneg %p60
        %p613 = pneg %p57
        %s614 = sand.u32 %s39, 1
        %s615 = scalar_lea.sflag [#allocation6], %s614
        %s616 = sand.u32 %s73, 1
        %s617 = smul.addr %s616, 8
        %s618 = scalar_lea.vmem [#allocation5], %s617
        %p619 = pneg %p86
        %p620 = pneg %p83
        %s621 = sand.u32 %s39, 1
        %s622 = scalar_lea.sflag [#allocation6], %s621
        %s623 = sand.u32 %s99, 1
        %s624 = smul.addr %s623, 8
        %s625 = scalar_lea.vmem [#allocation7], %s624
        %p626 = pneg %p112
        %p627 = pneg %p109
        %p628 = scmp.lt.s32.totalorder %s39, 1
        %s629 = scalar_select %p628, %s39, 1
        %s630 = scalar_lea.vmem %s3, %s629
        %p631 = pneg %p138
        %p632 = pneg %p135
        %p633 = pneg %p159
        %p634 = pneg %p156
        %p635 = pneg %p180
        %p636 = pneg %p177
        %p637 = pneg %p201
        %p638 = pneg %p198
        %p639 = pneg %p222
        %p640 = pneg %p219
        %p641 = pneg %p243
        %p642 = pneg %p240
        %p643 = pneg %p264
        %p644 = pneg %p261
        %p645 = pneg %p285
        %p646 = pneg %p282
        %p647 = pneg %p306
        %p648 = pneg %p303
        %p649 = pneg %p327
        %p650 = pneg %p324
        %p651 = pneg %p348
        %p652 = pneg %p345
        %p653 = pneg %p374
        %p654 = pneg %p371
        %s655 = sand.u32 %s361, 1
        %s656 = scalar_lea.sflag [#allocation4], %s655
        %s657 = sand.u32 %s361, 1
        %s658 = smul.addr %s657, 8
        %s659 = scalar_lea.vmem [#allocation16], %s658
        %p660 = pneg %p400
        %p661 = pneg %p397
        %p662 = scmp.lt.s32.totalorder %s39, 1
        %s663 = scalar_select %p662, %s39, 1
        %s664 = smul.addr %s663, 8
        %s665 = scalar_lea.vmem %s15, %s664
        %p666 = scmp.lt.s32.totalorder %s39, 1
        %s667 = scalar_select %p666, %s39, 1
        %s668 = scalar_lea.vmem %s3, %s667
        %p669 = scmp.lt.s32.totalorder %s39, 1
        %s670 = scalar_select %p669, %s39, 1
        %s671 = smul.addr %s670, 8
        %s672 = scalar_lea.vmem %s15, %s671
        %v673 = vld [vmem:[%s564] sm:$0xff]
        %v674 = vld [vmem:[%s573] sm:$0xff]
        %v675 = vld [vmem:[%s582] sm:$0xff]
        %v676 = vld [vmem:[%s4] sm:$0xff]
        %v677 = vld [vmem:[%s4 + $0x8] sm:$0xff]
        %v678 = vld [vmem:[%s4 + $0x10] sm:$0xff]
        %v679 = vld [vmem:[%s4 + $0x18] sm:$0xff]
        %v680 = vld [vmem:[#allocation8] sm:$0x1]
        %v682 = vlaneseq
        %v683 = vshrl.u32 %v682, 7
        %v684 = vsub.s32 0, %v683
        %v685 = vrot.slane %v680, %v684
        %vm687 = vcmask 261120
        %v689 = vsel %vm687, %v673, 0
        %691 = vmatprep.subr.mxu0 0.0
        %692 = vmatpush1.msra.mxu0 %v676
        %693 = vmatprep.subr.mxu0 0.0
        %694 = vmatpush1.msra.mxu0 %v677
        %695 = vmatprep.subr.mxu0 0.0
        %696 = vmatpush1.msra.mxu0 %v678
        %697 = vmatprep.subr.mxu0 0.0
        %698 = vmatpush1.msra.mxu0 %v679
        %699 = vmatprep.subr.mxu0 0.0
        %700 = vmatpush1.msra.mxu0 0.0
        %701 = vmatprep.subr.mxu0 0.0
        %702 = vmatpush1.msra.mxu0 0.0
        %703 = vmatprep.subr.mxu0 0.0
        %704 = vmatpush1.msra.mxu0 0.0
        %705 = vmatprep.subr.mxu0 0.0
        %706 = vmatpush1.msra.mxu0 0.0
        %707 = vmatprep.subr.mxu0 0.0
        %708 = vmatpush1.msra.mxu0 0.0
        %709 = vmatprep.subr.mxu0 0.0
        %710 = vmatpush1.msra.mxu0 0.0
        %711 = vmatprep.subr.mxu0 0.0
        %712 = vmatpush1.msra.mxu0 0.0
        %713 = vmatprep.subr.mxu0 0.0
        %714 = vmatpush1.msra.mxu0 0.0
        %715 = vmatprep.subr.mxu0 0.0
        %716 = vmatpush1.msra.mxu0 0.0
        %717 = vmatprep.subr.mxu0 0.0
        %718 = vmatpush1.msra.mxu0 0.0
        %719 = vmatprep.subr.mxu0 0.0
        %720 = vmatpush1.msra.mxu0 0.0
        %721 = vmatprep.subr.mxu0 0.0
        %722 = vmatpush1.msra.mxu0 0.0
        %723 = vmatprep.subr.mxu0 0.0
        %724 = vmatpush1.msra.mxu0 0.0
        %725 = vmatprep.subr.mxu0 0.0
        %726 = vmatpush1.msra.mxu0 0.0
        %727 = vmatprep.subr.mxu0 0.0
        %728 = vmatpush1.msra.mxu0 0.0
        %729 = vmatprep.subr.mxu0 0.0
        %730 = vmatpush1.msra.mxu0 0.0
        %731 = vmatprep.subr.mxu0 0.0
        %732 = vmatpush1.msra.mxu0 0.0
        %733 = vmatprep.subr.mxu0 0.0
        %734 = vmatpush1.msra.mxu0 0.0
        %735 = vmatprep.subr.mxu0 0.0
        %736 = vmatpush1.msra.mxu0 0.0
        %737 = vmatprep.subr.mxu0 0.0
        %738 = vmatpush1.msra.mxu0 0.0
        %739 = vmatprep.subr.mxu0 0.0
        %740 = vmatpush1.msra.mxu0 0.0
        %741 = vmatprep.subr.mxu0 0.0
        %742 = vmatpush1.msra.mxu0 0.0
        %743 = vmatprep.subr.mxu0 0.0
        %744 = vmatpush1.msra.mxu0 0.0
        %745 = vmatprep.subr.mxu0 0.0
        %746 = vmatpush1.msra.mxu0 0.0
        %747 = vmatprep.subr.mxu0 0.0
        %748 = vmatpush1.msra.mxu0 0.0
        %749 = vmatprep.subr.mxu0 0.0
        %750 = vmatpush1.msra.mxu0 0.0
        %751 = vmatprep.subr.mxu0 0.0
        %752 = vmatpush1.msra.mxu0 0.0
        %753 = vmatprep.subr.mxu0 0.0
        %754 = vmatpush1.msra.mxu0 0.0
        %755 = vmatprep.mubr.f32.mxu0 0.0
        %756 = vmatmul.mubr.f32.gmra.mrb[0].mxu0 %v689
        %v757 = vpop.f32.mrb[0].mxu0
        %v758 = vadd.f32 %v685, %v757
        %v759 = vpop.f32.mrb[0].mxu0
        %760 = vdwg.mxu0
        %v761 = vmul.f32 %v758, 0.35355338
        %v762 = vld [vmem:[#allocation10] sm:$0xff]
        %v763 = vld [vmem:[#allocation10 + $0x8] sm:$0xff]
        %v764 = vld [vmem:[#allocation10 + $0x10] sm:$0xff]
        %v765 = vld [vmem:[#allocation10 + $0x18] sm:$0xff]
        %v766 = vld [vmem:[#allocation11] sm:$0x1]
        %v768 = vlaneseq
        %v769 = vshrl.u32 %v768, 7
        %v770 = vsub.s32 0, %v769
        %v771 = vrot.slane %v766, %v770
        %v774 = vsel %vm687, %v674, 0
        %776 = vmatprep.subr.mxu0 0.0
        %777 = vmatpush1.msra.mxu0 %v762
        %778 = vmatprep.subr.mxu0 0.0
        %779 = vmatpush1.msra.mxu0 %v763
        %780 = vmatprep.subr.mxu0 0.0
        %781 = vmatpush1.msra.mxu0 %v764
        %782 = vmatprep.subr.mxu0 0.0
        %783 = vmatpush1.msra.mxu0 %v765
        %784 = vmatprep.subr.mxu0 0.0
        %785 = vmatpush1.msra.mxu0 0.0
        %786 = vmatprep.subr.mxu0 0.0
        %787 = vmatpush1.msra.mxu0 0.0
        %788 = vmatprep.subr.mxu0 0.0
        %789 = vmatpush1.msra.mxu0 0.0
        %790 = vmatprep.subr.mxu0 0.0
        %791 = vmatpush1.msra.mxu0 0.0
        %792 = vmatprep.subr.mxu0 0.0
        %793 = vmatpush1.msra.mxu0 0.0
        %794 = vmatprep.subr.mxu0 0.0
        %795 = vmatpush1.msra.mxu0 0.0
        %796 = vmatprep.subr.mxu0 0.0
        %797 = vmatpush1.msra.mxu0 0.0
        %798 = vmatprep.subr.mxu0 0.0
        %799 = vmatpush1.msra.mxu0 0.0
        %800 = vmatprep.subr.mxu0 0.0
        %801 = vmatpush1.msra.mxu0 0.0
        %802 = vmatprep.subr.mxu0 0.0
        %803 = vmatpush1.msra.mxu0 0.0
        %804 = vmatprep.subr.mxu0 0.0
        %805 = vmatpush1.msra.mxu0 0.0
        %806 = vmatprep.subr.mxu0 0.0
        %807 = vmatpush1.msra.mxu0 0.0
        %808 = vmatprep.subr.mxu0 0.0
        %809 = vmatpush1.msra.mxu0 0.0
        %810 = vmatprep.subr.mxu0 0.0
        %811 = vmatpush1.msra.mxu0 0.0
        %812 = vmatprep.subr.mxu0 0.0
        %813 = vmatpush1.msra.mxu0 0.0
        %814 = vmatprep.subr.mxu0 0.0
        %815 = vmatpush1.msra.mxu0 0.0
        %816 = vmatprep.subr.mxu0 0.0
        %817 = vmatpush1.msra.mxu0 0.0
        %818 = vmatprep.subr.mxu0 0.0
        %819 = vmatpush1.msra.mxu0 0.0
        %820 = vmatprep.subr.mxu0 0.0
        %821 = vmatpush1.msra.mxu0 0.0
        %822 = vmatprep.subr.mxu0 0.0
        %823 = vmatpush1.msra.mxu0 0.0
        %824 = vmatprep.subr.mxu0 0.0
        %825 = vmatpush1.msra.mxu0 0.0
        %826 = vmatprep.subr.mxu0 0.0
        %827 = vmatpush1.msra.mxu0 0.0
        %828 = vmatprep.subr.mxu0 0.0
        %829 = vmatpush1.msra.mxu0 0.0
        %830 = vmatprep.subr.mxu0 0.0
        %831 = vmatpush1.msra.mxu0 0.0
        %832 = vmatprep.subr.mxu0 0.0
        %833 = vmatpush1.msra.mxu0 0.0
        %834 = vmatprep.subr.mxu0 0.0
        %835 = vmatpush1.msra.mxu0 0.0
        %836 = vmatprep.subr.mxu0 0.0
        %837 = vmatpush1.msra.mxu0 0.0
        %838 = vmatprep.subr.mxu0 0.0
        %839 = vmatpush1.msra.mxu0 0.0
        %840 = vmatprep.mubr.f32.mxu0 0.0
        %841 = vmatmul.mubr.f32.gmra.mrb[0].mxu0 %v774
        %v842 = vpop.f32.mrb[0].mxu0
        %v843 = vadd.f32 %v771, %v842
        %v844 = vpop.f32.mrb[0].mxu0
        %845 = vdwg.mxu0
        %v846 = vld [vmem:[#allocation13] sm:$0xff]
        %v847 = vld [vmem:[#allocation13 + $0x8] sm:$0xff]
        %v848 = vld [vmem:[#allocation13 + $0x10] sm:$0xff]
        %v849 = vld [vmem:[#allocation13 + $0x18] sm:$0xff]
        %v850 = vld [vmem:[#allocation14] sm:$0x1]
        %v852 = vlaneseq
        %v853 = vshrl.u32 %v852, 7
        %v854 = vsub.s32 0, %v853
        %v855 = vrot.slane %v850, %v854
        %v858 = vsel %vm687, %v675, 0
        %860 = vmatprep.subr.mxu0 0.0
        %861 = vmatpush1.msra.mxu0 %v846
        %862 = vmatprep.subr.mxu0 0.0
        %863 = vmatpush1.msra.mxu0 %v847
        %864 = vmatprep.subr.mxu0 0.0
        %865 = vmatpush1.msra.mxu0 %v848
        %866 = vmatprep.subr.mxu0 0.0
        %867 = vmatpush1.msra.mxu0 %v849
        %868 = vmatprep.subr.mxu0 0.0
        %869 = vmatpush1.msra.mxu0 0.0
        %870 = vmatprep.subr.mxu0 0.0
        %871 = vmatpush1.msra.mxu0 0.0
        %872 = vmatprep.subr.mxu0 0.0
        %873 = vmatpush1.msra.mxu0 0.0
        %874 = vmatprep.subr.mxu0 0.0
        %875 = vmatpush1.msra.mxu0 0.0
        %876 = vmatprep.subr.mxu0 0.0
        %877 = vmatpush1.msra.mxu0 0.0
        %878 = vmatprep.subr.mxu0 0.0
        %879 = vmatpush1.msra.mxu0 0.0
        %880 = vmatprep.subr.mxu0 0.0
        %881 = vmatpush1.msra.mxu0 0.0
        %882 = vmatprep.subr.mxu0 0.0
        %883 = vmatpush1.msra.mxu0 0.0
        %884 = vmatprep.subr.mxu0 0.0
        %885 = vmatpush1.msra.mxu0 0.0
        %886 = vmatprep.subr.mxu0 0.0
        %887 = vmatpush1.msra.mxu0 0.0
        %888 = vmatprep.subr.mxu0 0.0
        %889 = vmatpush1.msra.mxu0 0.0
        %890 = vmatprep.subr.mxu0 0.0
        %891 = vmatpush1.msra.mxu0 0.0
        %892 = vmatprep.subr.mxu0 0.0
        %893 = vmatpush1.msra.mxu0 0.0
        %894 = vmatprep.subr.mxu0 0.0
        %895 = vmatpush1.msra.mxu0 0.0
        %896 = vmatprep.subr.mxu0 0.0
        %897 = vmatpush1.msra.mxu0 0.0
        %898 = vmatprep.subr.mxu0 0.0
        %899 = vmatpush1.msra.mxu0 0.0
        %900 = vmatprep.subr.mxu0 0.0
        %901 = vmatpush1.msra.mxu0 0.0
        %902 = vmatprep.subr.mxu0 0.0
        %903 = vmatpush1.msra.mxu0 0.0
        %904 = vmatprep.subr.mxu0 0.0
        %905 = vmatpush1.msra.mxu0 0.0
        %906 = vmatprep.subr.mxu0 0.0
        %907 = vmatpush1.msra.mxu0 0.0
        %908 = vmatprep.subr.mxu0 0.0
        %909 = vmatpush1.msra.mxu0 0.0
        %910 = vmatprep.subr.mxu0 0.0
        %911 = vmatpush1.msra.mxu0 0.0
        %912 = vmatprep.subr.mxu0 0.0
        %913 = vmatpush1.msra.mxu0 0.0
        %914 = vmatprep.subr.mxu0 0.0
        %915 = vmatpush1.msra.mxu0 0.0
        %916 = vmatprep.subr.mxu0 0.0
        %917 = vmatpush1.msra.mxu0 0.0
        %918 = vmatprep.subr.mxu0 0.0
        %919 = vmatpush1.msra.mxu0 0.0
        %920 = vmatprep.subr.mxu0 0.0
        %921 = vmatpush1.msra.mxu0 0.0
        %922 = vmatprep.subr.mxu0 0.0
        %923 = vmatpush1.msra.mxu0 0.0
        %924 = vmatprep.mubr.f32.mxu0 0.0
        %925 = vmatmul.mubr.f32.gmra.mrb[0].mxu0 %v858
        %v926 = vpop.f32.mrb[0].mxu0
        %v927 = vadd.f32 %v855, %v926
        %v928 = vpop.f32.mrb[0].mxu0
        %929 = vdwg.mxu0
        %v930 = vld [vmem:[%s668] sm:$0x1]
        %v931 = vld [vmem:[%s11] sm:$0x1]
        %v933 = vlaneseq
        %v934 = vshrl.u32 %v933, 7
        %v935 = vsub.s32 0, %v934
        %v936 = vrot.slane %v931, %v935
        %v938 = vadd.f32 %v673, %v936
        %v940 = vlaneseq
        %v941 = vshrl.u32 %v940, 7
        %v942 = vsub.s32 0, %v941
        %v943 = vrot.slane %v930, %v942
        %vm945 = vcmask 64512
        %v947 = vsel %vm945, %v761, 0
        %v950 = vsel %vm945, %v843, 0
        %952 = vmatprep.subr.mxu0 0.0
        %953 = vmatpush1.xpose.msra.mxu0 %v950
        %954 = vmatprep.subr.mxu0 0.0
        %955 = vmatpush1.xpose.msra.mxu0 0.0
        %956 = vmatprep.subr.mxu0 0.0
        %957 = vmatpush1.xpose.msra.mxu0 0.0
        %958 = vmatprep.subr.mxu0 0.0
        %959 = vmatpush1.xpose.msra.mxu0 0.0
        %960 = vmatprep.subr.mxu0 0.0
        %961 = vmatpush1.xpose.msra.mxu0 0.0
        %962 = vmatprep.subr.mxu0 0.0
        %963 = vmatpush1.xpose.msra.mxu0 0.0
        %964 = vmatprep.subr.mxu0 0.0
        %965 = vmatpush1.xpose.msra.mxu0 0.0
        %966 = vmatprep.subr.mxu0 0.0
        %967 = vmatpush1.xpose.msra.mxu0 0.0
        %968 = vmatprep.subr.mxu0 0.0
        %969 = vmatpush1.xpose.msra.mxu0 0.0
        %970 = vmatprep.subr.mxu0 0.0
        %971 = vmatpush1.xpose.msra.mxu0 0.0
        %972 = vmatprep.subr.mxu0 0.0
        %973 = vmatpush1.xpose.msra.mxu0 0.0
        %974 = vmatprep.subr.mxu0 0.0
        %975 = vmatpush1.xpose.msra.mxu0 0.0
        %976 = vmatprep.subr.mxu0 0.0
        %977 = vmatpush1.xpose.msra.mxu0 0.0
        %978 = vmatprep.subr.mxu0 0.0
        %979 = vmatpush1.xpose.msra.mxu0 0.0
        %980 = vmatprep.subr.mxu0 0.0
        %981 = vmatpush1.xpose.msra.mxu0 0.0
        %982 = vmatprep.subr.mxu0 0.0
        %983 = vmatpush1.xpose.msra.mxu0 0.0
        %984 = vmatprep.subr.mxu0 0.0
        %985 = vmatpush1.xpose.msra.mxu0 0.0
        %986 = vmatprep.subr.mxu0 0.0
        %987 = vmatpush1.xpose.msra.mxu0 0.0
        %988 = vmatprep.subr.mxu0 0.0
        %989 = vmatpush1.xpose.msra.mxu0 0.0
        %990 = vmatprep.subr.mxu0 0.0
        %991 = vmatpush1.xpose.msra.mxu0 0.0
        %992 = vmatprep.subr.mxu0 0.0
        %993 = vmatpush1.xpose.msra.mxu0 0.0
        %994 = vmatprep.subr.mxu0 0.0
        %995 = vmatpush1.xpose.msra.mxu0 0.0
        %996 = vmatprep.subr.mxu0 0.0
        %997 = vmatpush1.xpose.msra.mxu0 0.0
        %998 = vmatprep.subr.mxu0 0.0
        %999 = vmatpush1.xpose.msra.mxu0 0.0
        %1000 = vmatprep.subr.mxu0 0.0
        %1001 = vmatpush1.xpose.msra.mxu0 0.0
        %1002 = vmatprep.subr.mxu0 0.0
        %1003 = vmatpush1.xpose.msra.mxu0 0.0
        %1004 = vmatprep.subr.mxu0 0.0
        %1005 = vmatpush1.xpose.msra.mxu0 0.0
        %1006 = vmatprep.subr.mxu0 0.0
        %1007 = vmatpush1.xpose.msra.mxu0 0.0
        %1008 = vmatprep.subr.mxu0 0.0
        %1009 = vmatpush1.xpose.msra.mxu0 0.0
        %1010 = vmatprep.subr.mxu0 0.0
        %1011 = vmatpush1.xpose.msra.mxu0 0.0
        %1012 = vmatprep.subr.mxu0 0.0
        %1013 = vmatpush1.xpose.msra.mxu0 0.0
        %1014 = vmatprep.subr.mxu0 0.0
        %1015 = vmatpush1.xpose.msra.mxu0 0.0
        %1016 = vmatprep.mubr.f32.mxu0 0.0
        %1017 = vmatmul.mubr.f32.gmra.mrb[0].mxu0 %v947
        %v1018 = vpop.f32.mrb[0].mxu0
        %v1019 = vadd.f32 %v943, %v1018
        %v1020 = vpop.f32.mrb[0].mxu0
        %1021 = vdwg.mxu0
        %v1022 = vsel %vm945, %v1019, -inf
        %1023 = vmax.xlane.f32.xlu0 %v1022
        %v1024 = vpop.xlane.xlu0 %1023
        %v1025 = vsub.f32 %v1019, %v1024
        %v1026 = vmul.f32 %v1025, 1.442695
        %v1027 = vpow.pop %v1026
        %v1028 = vsel %vm945, %v1027, 0.0
        %1029 = vadd.xlane.f32.xlu0 %v1028
        %v1030 = vpop.xlane.xlu0 %1029
        %v1031 = vrcp.pop %v1030
        %v1032 = vmul.f32 %v1027, %v1031
        %1033 = vst.msk [vmem:[%s672] sm:$0xff] %vm945, %v1032
        %v1035 = vsel %vm945, %v1032, 0
        %1037 = vmatprep.subr.mxu0 0.0
        %1038 = vmatpush1.msra.mxu0 %v927
        %1039 = vmatprep.subr.mxu0 0.0
        %1040 = vmatpush1.msra.mxu0 0.0
        %1041 = vmatprep.subr.mxu0 0.0
        %1042 = vmatpush1.msra.mxu0 0.0
        %1043 = vmatprep.subr.mxu0 0.0
        %1044 = vmatpush1.msra.mxu0 0.0
        %1045 = vmatprep.subr.mxu0 0.0
        %1046 = vmatpush1.msra.mxu0 0.0
        %1047 = vmatprep.subr.mxu0 0.0
        %1048 = vmatpush1.msra.mxu0 0.0
        %1049 = vmatprep.subr.mxu0 0.0
        %1050 = vmatpush1.msra.mxu0 0.0
        %1051 = vmatprep.subr.mxu0 0.0
        %1052 = vmatpush1.msra.mxu0 0.0
        %1053 = vmatprep.subr.mxu0 0.0
        %1054 = vmatpush1.msra.mxu0 0.0
        %1055 = vmatprep.subr.mxu0 0.0
        %1056 = vmatpush1.msra.mxu0 0.0
        %1057 = vmatprep.subr.mxu0 0.0
        %1058 = vmatpush1.msra.mxu0 0.0
        %1059 = vmatprep.subr.mxu0 0.0
        %1060 = vmatpush1.msra.mxu0 0.0
        %1061 = vmatprep.subr.mxu0 0.0
        %1062 = vmatpush1.msra.mxu0 0.0
        %1063 = vmatprep.subr.mxu0 0.0
        %1064 = vmatpush1.msra.mxu0 0.0
        %1065 = vmatprep.subr.mxu0 0.0
        %1066 = vmatpush1.msra.mxu0 0.0
        %1067 = vmatprep.subr.mxu0 0.0
        %1068 = vmatpush1.msra.mxu0 0.0
        %1069 = vmatprep.subr.mxu0 0.0
        %1070 = vmatpush1.msra.mxu0 0.0
        %1071 = vmatprep.subr.mxu0 0.0
        %1072 = vmatpush1.msra.mxu0 0.0
        %1073 = vmatprep.subr.mxu0 0.0
        %1074 = vmatpush1.msra.mxu0 0.0
        %1075 = vmatprep.subr.mxu0 0.0
        %1076 = vmatpush1.msra.mxu0 0.0
        %1077 = vmatprep.subr.mxu0 0.0
        %1078 = vmatpush1.msra.mxu0 0.0
        %1079 = vmatprep.subr.mxu0 0.0
        %1080 = vmatpush1.msra.mxu0 0.0
        %1081 = vmatprep.subr.mxu0 0.0
        %1082 = vmatpush1.msra.mxu0 0.0
        %1083 = vmatprep.subr.mxu0 0.0
        %1084 = vmatpush1.msra.mxu0 0.0
        %1085 = vmatprep.subr.mxu0 0.0
        %1086 = vmatpush1.msra.mxu0 0.0
        %1087 = vmatprep.subr.mxu0 0.0
        %1088 = vmatpush1.msra.mxu0 0.0
        %1089 = vmatprep.subr.mxu0 0.0
        %1090 = vmatpush1.msra.mxu0 0.0
        %1091 = vmatprep.subr.mxu0 0.0
        %1092 = vmatpush1.msra.mxu0 0.0
        %1093 = vmatprep.subr.mxu0 0.0
        %1094 = vmatpush1.msra.mxu0 0.0
        %1095 = vmatprep.subr.mxu0 0.0
        %1096 = vmatpush1.msra.mxu0 0.0
        %1097 = vmatprep.subr.mxu0 0.0
        %1098 = vmatpush1.msra.mxu0 0.0
        %1099 = vmatprep.subr.mxu0 0.0
        %1100 = vmatpush1.msra.mxu0 0.0
        %1101 = vmatprep.mubr.f32.mxu0 0.0
        %1102 = vmatmul.mubr.f32.gmra.mrb[0].mxu0 %v1035
        %v1103 = vpop.f32.mrb[0].mxu0
        %v1104 = vadd.f32 0.0, %v1103
        %v1105 = vpop.f32.mrb[0].mxu0
        %1106 = vdwg.mxu0
        %v1107 = vld [vmem:[%s10] sm:$0xff]
        %v1109 = vsel %vm945, %v1104, 0
        %1111 = vmatprep.subr.mxu0 0.0
        %1112 = vmatpush1.msra.mxu0 %v1107
        %1113 = vmatprep.subr.mxu0 0.0
        %1114 = vmatpush1.msra.mxu0 0.0
        %1115 = vmatprep.subr.mxu0 0.0
        %1116 = vmatpush1.msra.mxu0 0.0
        %1117 = vmatprep.subr.mxu0 0.0
        %1118 = vmatpush1.msra.mxu0 0.0
        %1119 = vmatprep.subr.mxu0 0.0
        %1120 = vmatpush1.msra.mxu0 0.0
        %1121 = vmatprep.subr.mxu0 0.0
        %1122 = vmatpush1.msra.mxu0 0.0
        %1123 = vmatprep.subr.mxu0 0.0
        %1124 = vmatpush1.msra.mxu0 0.0
        %1125 = vmatprep.subr.mxu0 0.0
        %1126 = vmatpush1.msra.mxu0 0.0
        %1127 = vmatprep.subr.mxu0 0.0
        %1128 = vmatpush1.msra.mxu0 0.0
        %1129 = vmatprep.subr.mxu0 0.0
        %1130 = vmatpush1.msra.mxu0 0.0
        %1131 = vmatprep.subr.mxu0 0.0
        %1132 = vmatpush1.msra.mxu0 0.0
        %1133 = vmatprep.subr.mxu0 0.0
        %1134 = vmatpush1.msra.mxu0 0.0
        %1135 = vmatprep.subr.mxu0 0.0
        %1136 = vmatpush1.msra.mxu0 0.0
        %1137 = vmatprep.subr.mxu0 0.0
        %1138 = vmatpush1.msra.mxu0 0.0
        %1139 = vmatprep.subr.mxu0 0.0
        %1140 = vmatpush1.msra.mxu0 0.0
        %1141 = vmatprep.subr.mxu0 0.0
        %1142 = vmatpush1.msra.mxu0 0.0
        %1143 = vmatprep.subr.mxu0 0.0
        %1144 = vmatpush1.msra.mxu0 0.0
        %1145 = vmatprep.subr.mxu0 0.0
        %1146 = vmatpush1.msra.mxu0 0.0
        %1147 = vmatprep.subr.mxu0 0.0
        %1148 = vmatpush1.msra.mxu0 0.0
        %1149 = vmatprep.subr.mxu0 0.0
        %1150 = vmatpush1.msra.mxu0 0.0
        %1151 = vmatprep.subr.mxu0 0.0
        %1152 = vmatpush1.msra.mxu0 0.0
        %1153 = vmatprep.subr.mxu0 0.0
        %1154 = vmatpush1.msra.mxu0 0.0
        %1155 = vmatprep.subr.mxu0 0.0
        %1156 = vmatpush1.msra.mxu0 0.0
        %1157 = vmatprep.subr.mxu0 0.0
        %1158 = vmatpush1.msra.mxu0 0.0
        %1159 = vmatprep.subr.mxu0 0.0
        %1160 = vmatpush1.msra.mxu0 0.0
        %1161 = vmatprep.subr.mxu0 0.0
        %1162 = vmatpush1.msra.mxu0 0.0
        %1163 = vmatprep.subr.mxu0 0.0
        %1164 = vmatpush1.msra.mxu0 0.0
        %1165 = vmatprep.subr.mxu0 0.0
        %1166 = vmatpush1.msra.mxu0 0.0
        %1167 = vmatprep.subr.mxu0 0.0
        %1168 = vmatpush1.msra.mxu0 0.0
        %1169 = vmatprep.subr.mxu0 0.0
        %1170 = vmatpush1.msra.mxu0 0.0
        %1171 = vmatprep.subr.mxu0 0.0
        %1172 = vmatpush1.msra.mxu0 0.0
        %1173 = vmatprep.subr.mxu0 0.0
        %1174 = vmatpush1.msra.mxu0 0.0
        %1175 = vmatprep.mubr.f32.mxu0 0.0
        %1176 = vmatmul.mubr.f32.gmra.mrb[0].mxu0 %v1109
        %v1177 = vpop.f32.mrb[0].mxu0
        %v1178 = vadd.f32 0.0, %v1177
        %v1179 = vpop.f32.mrb[0].mxu0
        %1180 = vdwg.mxu0
        %v1181 = vadd.f32 %v938, %v1178
        %1182 = vrot.lane.b32.xlu0 %v761, 120
        %v1183 = vpop.permute.xlu0 %1182
        %1184 = vrot.lane.b32.xlu0 %v843, 120
        %v1185 = vpop.permute.xlu0 %1184
        %v1186 = vsel %vm945, %v1183, 0
        %v1188 = vsel %vm945, %v1185, 0
        %1190 = vmatprep.subr.mxu0 0.0
        %1191 = vmatpush1.xpose.msra.mxu0 %v1188
        %1192 = vmatprep.subr.mxu0 0.0
        %1193 = vmatpush1.xpose.msra.mxu0 0.0
        %1194 = vmatprep.subr.mxu0 0.0
        %1195 = vmatpush1.xpose.msra.mxu0 0.0
        %1196 = vmatprep.subr.mxu0 0.0
        %1197 = vmatpush1.xpose.msra.mxu0 0.0
        %1198 = vmatprep.subr.mxu0 0.0
        %1199 = vmatpush1.xpose.msra.mxu0 0.0
        %1200 = vmatprep.subr.mxu0 0.0
        %1201 = vmatpush1.xpose.msra.mxu0 0.0
        %1202 = vmatprep.subr.mxu0 0.0
        %1203 = vmatpush1.xpose.msra.mxu0 0.0
        %1204 = vmatprep.subr.mxu0 0.0
        %1205 = vmatpush1.xpose.msra.mxu0 0.0
        %1206 = vmatprep.subr.mxu0 0.0
        %1207 = vmatpush1.xpose.msra.mxu0 0.0
        %1208 = vmatprep.subr.mxu0 0.0
        %1209 = vmatpush1.xpose.msra.mxu0 0.0
        %1210 = vmatprep.subr.mxu0 0.0
        %1211 = vmatpush1.xpose.msra.mxu0 0.0
        %1212 = vmatprep.subr.mxu0 0.0
        %1213 = vmatpush1.xpose.msra.mxu0 0.0
        %1214 = vmatprep.subr.mxu0 0.0
        %1215 = vmatpush1.xpose.msra.mxu0 0.0
        %1216 = vmatprep.subr.mxu0 0.0
        %1217 = vmatpush1.xpose.msra.mxu0 0.0
        %1218 = vmatprep.subr.mxu0 0.0
        %1219 = vmatpush1.xpose.msra.mxu0 0.0
        %1220 = vmatprep.subr.mxu0 0.0
        %1221 = vmatpush1.xpose.msra.mxu0 0.0
        %1222 = vmatprep.subr.mxu0 0.0
        %1223 = vmatpush1.xpose.msra.mxu0 0.0
        %1224 = vmatprep.subr.mxu0 0.0
        %1225 = vmatpush1.xpose.msra.mxu0 0.0
        %1226 = vmatprep.subr.mxu0 0.0
        %1227 = vmatpush1.xpose.msra.mxu0 0.0
        %1228 = vmatprep.subr.mxu0 0.0
        %1229 = vmatpush1.xpose.msra.mxu0 0.0
        %1230 = vmatprep.subr.mxu0 0.0
        %1231 = vmatpush1.xpose.msra.mxu0 0.0
        %1232 = vmatprep.subr.mxu0 0.0
        %1233 = vmatpush1.xpose.msra.mxu0 0.0
        %1234 = vmatprep.subr.mxu0 0.0
        %1235 = vmatpush1.xpose.msra.mxu0 0.0
        %1236 = vmatprep.subr.mxu0 0.0
        %1237 = vmatpush1.xpose.msra.mxu0 0.0
        %1238 = vmatprep.subr.mxu0 0.0
        %1239 = vmatpush1.xpose.msra.mxu0 0.0
        %1240 = vmatprep.subr.mxu0 0.0
        %1241 = vmatpush1.xpose.msra.mxu0 0.0
        %1242 = vmatprep.subr.mxu0 0.0
        %1243 = vmatpush1.xpose.msra.mxu0 0.0
        %1244 = vmatprep.subr.mxu0 0.0
        %1245 = vmatpush1.xpose.msra.mxu0 0.0
        %1246 = vmatprep.subr.mxu0 0.0
        %1247 = vmatpush1.xpose.msra.mxu0 0.0
        %1248 = vmatprep.subr.mxu0 0.0
        %1249 = vmatpush1.xpose.msra.mxu0 0.0
        %1250 = vmatprep.subr.mxu0 0.0
        %1251 = vmatpush1.xpose.msra.mxu0 0.0
        %1252 = vmatprep.subr.mxu0 0.0
        %1253 = vmatpush1.xpose.msra.mxu0 0.0
        %1254 = vmatprep.mubr.f32.mxu0 0.0
        %1255 = vmatmul.mubr.f32.gmra.mrb[0].mxu0 %v1186
        %v1256 = vpop.f32.mrb[0].mxu0
        %v1257 = vadd.f32 %v943, %v1256
        %v1258 = vpop.f32.mrb[0].mxu0
        %1259 = vdwg.mxu0
        %v1260 = vsel %vm945, %v1257, -inf
        %1261 = vmax.xlane.f32.xlu0 %v1260
        %v1262 = vpop.xlane.xlu0 %1261
        %v1263 = vsub.f32 %v1257, %v1262
        %v1264 = vmul.f32 %v1263, 1.442695
        %v1265 = vpow.pop %v1264
        %v1266 = vsel %vm945, %v1265, 0.0
        %1267 = vadd.xlane.f32.xlu0 %v1266
        %v1268 = vpop.xlane.xlu0 %1267
        %v1269 = vrcp.pop %v1268
        %v1270 = vmul.f32 %v1265, %v1269
        %1272 = vrot.lane.b32.xlu0 %v1270, 8
        %v1273 = vpop.permute.xlu0 %1272
        %vm1275 = vcmask 130112
        %1276 = vst.msk [vmem:[%s672] sm:$0xff] %vm1275, %v1273
        %1278 = vrot.lane.b32.xlu0 %v927, 120
        %v1279 = vpop.permute.xlu0 %1278
        %v1281 = vsel %vm945, %v1270, 0
        %1283 = vmatprep.subr.mxu0 0.0
        %1284 = vmatpush1.msra.mxu0 %v1279
        %1285 = vmatprep.subr.mxu0 0.0
        %1286 = vmatpush1.msra.mxu0 0.0
        %1287 = vmatprep.subr.mxu0 0.0
        %1288 = vmatpush1.msra.mxu0 0.0
        %1289 = vmatprep.subr.mxu0 0.0
        %1290 = vmatpush1.msra.mxu0 0.0
        %1291 = vmatprep.subr.mxu0 0.0
        %1292 = vmatpush1.msra.mxu0 0.0
        %1293 = vmatprep.subr.mxu0 0.0
        %1294 = vmatpush1.msra.mxu0 0.0
        %1295 = vmatprep.subr.mxu0 0.0
        %1296 = vmatpush1.msra.mxu0 0.0
        %1297 = vmatprep.subr.mxu0 0.0
        %1298 = vmatpush1.msra.mxu0 0.0
        %1299 = vmatprep.subr.mxu0 0.0
        %1300 = vmatpush1.msra.mxu0 0.0
        %1301 = vmatprep.subr.mxu0 0.0
        %1302 = vmatpush1.msra.mxu0 0.0
        %1303 = vmatprep.subr.mxu0 0.0
        %1304 = vmatpush1.msra.mxu0 0.0
        %1305 = vmatprep.subr.mxu0 0.0
        %1306 = vmatpush1.msra.mxu0 0.0
        %1307 = vmatprep.subr.mxu0 0.0
        %1308 = vmatpush1.msra.mxu0 0.0
        %1309 = vmatprep.subr.mxu0 0.0
        %1310 = vmatpush1.msra.mxu0 0.0
        %1311 = vmatprep.subr.mxu0 0.0
        %1312 = vmatpush1.msra.mxu0 0.0
        %1313 = vmatprep.subr.mxu0 0.0
        %1314 = vmatpush1.msra.mxu0 0.0
        %1315 = vmatprep.subr.mxu0 0.0
        %1316 = vmatpush1.msra.mxu0 0.0
        %1317 = vmatprep.subr.mxu0 0.0
        %1318 = vmatpush1.msra.mxu0 0.0
        %1319 = vmatprep.subr.mxu0 0.0
        %1320 = vmatpush1.msra.mxu0 0.0
        %1321 = vmatprep.subr.mxu0 0.0
        %1322 = vmatpush1.msra.mxu0 0.0
        %1323 = vmatprep.subr.mxu0 0.0
        %1324 = vmatpush1.msra.mxu0 0.0
        %1325 = vmatprep.subr.mxu0 0.0
        %1326 = vmatpush1.msra.mxu0 0.0
        %1327 = vmatprep.subr.mxu0 0.0
        %1328 = vmatpush1.msra.mxu0 0.0
        %1329 = vmatprep.subr.mxu0 0.0
        %1330 = vmatpush1.msra.mxu0 0.0
        %1331 = vmatprep.subr.mxu0 0.0
        %1332 = vmatpush1.msra.mxu0 0.0
        %1333 = vmatprep.subr.mxu0 0.0
        %1334 = vmatpush1.msra.mxu0 0.0
        %1335 = vmatprep.subr.mxu0 0.0
        %1336 = vmatpush1.msra.mxu0 0.0
        %1337 = vmatprep.subr.mxu0 0.0
        %1338 = vmatpush1.msra.mxu0 0.0
        %1339 = vmatprep.subr.mxu0 0.0
        %1340 = vmatpush1.msra.mxu0 0.0
        %1341 = vmatprep.subr.mxu0 0.0
        %1342 = vmatpush1.msra.mxu0 0.0
        %1343 = vmatprep.subr.mxu0 0.0
        %1344 = vmatpush1.msra.mxu0 0.0
        %1345 = vmatprep.subr.mxu0 0.0
        %1346 = vmatpush1.msra.mxu0 0.0
        %1347 = vmatprep.mubr.f32.mxu0 0.0
        %1348 = vmatmul.mubr.f32.gmra.mrb[0].mxu0 %v1281
        %v1349 = vpop.f32.mrb[0].mxu0
        %v1350 = vadd.f32 0.0, %v1349
        %v1351 = vpop.f32.mrb[0].mxu0
        %1352 = vdwg.mxu0
        %v1353 = vld [vmem:[%s10 + $0x8] sm:$0xff]
        %v1355 = vsel %vm945, %v1350, 0
        %1357 = vmatprep.subr.mxu0 0.0
        %1358 = vmatpush1.msra.mxu0 %v1353
        %1359 = vmatprep.subr.mxu0 0.0
        %1360 = vmatpush1.msra.mxu0 0.0
        %1361 = vmatprep.subr.mxu0 0.0
        %1362 = vmatpush1.msra.mxu0 0.0
        %1363 = vmatprep.subr.mxu0 0.0
        %1364 = vmatpush1.msra.mxu0 0.0
        %1365 = vmatprep.subr.mxu0 0.0
        %1366 = vmatpush1.msra.mxu0 0.0
        %1367 = vmatprep.subr.mxu0 0.0
        %1368 = vmatpush1.msra.mxu0 0.0
        %1369 = vmatprep.subr.mxu0 0.0
        %1370 = vmatpush1.msra.mxu0 0.0
        %1371 = vmatprep.subr.mxu0 0.0
        %1372 = vmatpush1.msra.mxu0 0.0
        %1373 = vmatprep.subr.mxu0 0.0
        %1374 = vmatpush1.msra.mxu0 0.0
        %1375 = vmatprep.subr.mxu0 0.0
        %1376 = vmatpush1.msra.mxu0 0.0
        %1377 = vmatprep.subr.mxu0 0.0
        %1378 = vmatpush1.msra.mxu0 0.0
        %1379 = vmatprep.subr.mxu0 0.0
        %1380 = vmatpush1.msra.mxu0 0.0
        %1381 = vmatprep.subr.mxu0 0.0
        %1382 = vmatpush1.msra.mxu0 0.0
        %1383 = vmatprep.subr.mxu0 0.0
        %1384 = vmatpush1.msra.mxu0 0.0
        %1385 = vmatprep.subr.mxu0 0.0
        %1386 = vmatpush1.msra.mxu0 0.0
        %1387 = vmatprep.subr.mxu0 0.0
        %1388 = vmatpush1.msra.mxu0 0.0
        %1389 = vmatprep.subr.mxu0 0.0
        %1390 = vmatpush1.msra.mxu0 0.0
        %1391 = vmatprep.subr.mxu0 0.0
        %1392 = vmatpush1.msra.mxu0 0.0
        %1393 = vmatprep.subr.mxu0 0.0
        %1394 = vmatpush1.msra.mxu0 0.0
        %1395 = vmatprep.subr.mxu0 0.0
        %1396 = vmatpush1.msra.mxu0 0.0
        %1397 = vmatprep.subr.mxu0 0.0
        %1398 = vmatpush1.msra.mxu0 0.0
        %1399 = vmatprep.subr.mxu0 0.0
        %1400 = vmatpush1.msra.mxu0 0.0
        %1401 = vmatprep.subr.mxu0 0.0
        %1402 = vmatpush1.msra.mxu0 0.0
        %1403 = vmatprep.subr.mxu0 0.0
        %1404 = vmatpush1.msra.mxu0 0.0
        %1405 = vmatprep.subr.mxu0 0.0
        %1406 = vmatpush1.msra.mxu0 0.0
        %1407 = vmatprep.subr.mxu0 0.0
        %1408 = vmatpush1.msra.mxu0 0.0
        %1409 = vmatprep.subr.mxu0 0.0
        %1410 = vmatpush1.msra.mxu0 0.0
        %1411 = vmatprep.subr.mxu0 0.0
        %1412 = vmatpush1.msra.mxu0 0.0
        %1413 = vmatprep.subr.mxu0 0.0
        %1414 = vmatpush1.msra.mxu0 0.0
        %1415 = vmatprep.subr.mxu0 0.0
        %1416 = vmatpush1.msra.mxu0 0.0
        %1417 = vmatprep.subr.mxu0 0.0
        %1418 = vmatpush1.msra.mxu0 0.0
        %1419 = vmatprep.subr.mxu0 0.0
        %1420 = vmatpush1.msra.mxu0 0.0
        %1421 = vmatprep.mubr.f32.mxu0 0.0
        %1422 = vmatmul.mubr.f32.gmra.mrb[0].mxu0 %v1355
        %v1423 = vpop.f32.mrb[0].mxu0
        %v1424 = vadd.f32 0.0, %v1423
        %v1425 = vpop.f32.mrb[0].mxu0
        %1426 = vdwg.mxu0
        %v1427 = vadd.f32 %v1181, %v1424
        %1428 = vrot.lane.b32.xlu0 %v761, 112
        %v1429 = vpop.permute.xlu0 %1428
        %1430 = vrot.lane.b32.xlu0 %v843, 112
        %v1431 = vpop.permute.xlu0 %1430
        %v1432 = vsel %vm945, %v1429, 0
        %v1434 = vsel %vm945, %v1431, 0
        %1436 = vmatprep.subr.mxu0 0.0
        %1437 = vmatpush1.xpose.msra.mxu0 %v1434
        %1438 = vmatprep.subr.mxu0 0.0
        %1439 = vmatpush1.xpose.msra.mxu0 0.0
        %1440 = vmatprep.subr.mxu0 0.0
        %1441 = vmatpush1.xpose.msra.mxu0 0.0
        %1442 = vmatprep.subr.mxu0 0.0
        %1443 = vmatpush1.xpose.msra.mxu0 0.0
        %1444 = vmatprep.subr.mxu0 0.0
        %1445 = vmatpush1.xpose.msra.mxu0 0.0
        %1446 = vmatprep.subr.mxu0 0.0
        %1447 = vmatpush1.xpose.msra.mxu0 0.0
        %1448 = vmatprep.subr.mxu0 0.0
        %1449 = vmatpush1.xpose.msra.mxu0 0.0
        %1450 = vmatprep.subr.mxu0 0.0
        %1451 = vmatpush1.xpose.msra.mxu0 0.0
        %1452 = vmatprep.subr.mxu0 0.0
        %1453 = vmatpush1.xpose.msra.mxu0 0.0
        %1454 = vmatprep.subr.mxu0 0.0
        %1455 = vmatpush1.xpose.msra.mxu0 0.0
        %1456 = vmatprep.subr.mxu0 0.0
        %1457 = vmatpush1.xpose.msra.mxu0 0.0
        %1458 = vmatprep.subr.mxu0 0.0
        %1459 = vmatpush1.xpose.msra.mxu0 0.0
        %1460 = vmatprep.subr.mxu0 0.0
        %1461 = vmatpush1.xpose.msra.mxu0 0.0
        %1462 = vmatprep.subr.mxu0 0.0
        %1463 = vmatpush1.xpose.msra.mxu0 0.0
        %1464 = vmatprep.subr.mxu0 0.0
        %1465 = vmatpush1.xpose.msra.mxu0 0.0
        %1466 = vmatprep.subr.mxu0 0.0
        %1467 = vmatpush1.xpose.msra.mxu0 0.0
        %1468 = vmatprep.subr.mxu0 0.0
        %1469 = vmatpush1.xpose.msra.mxu0 0.0
        %1470 = vmatprep.subr.mxu0 0.0
        %1471 = vmatpush1.xpose.msra.mxu0 0.0
        %1472 = vmatprep.subr.mxu0 0.0
        %1473 = vmatpush1.xpose.msra.mxu0 0.0
        %1474 = vmatprep.subr.mxu0 0.0
        %1475 = vmatpush1.xpose.msra.mxu0 0.0
        %1476 = vmatprep.subr.mxu0 0.0
        %1477 = vmatpush1.xpose.msra.mxu0 0.0
        %1478 = vmatprep.subr.mxu0 0.0
        %1479 = vmatpush1.xpose.msra.mxu0 0.0
        %1480 = vmatprep.subr.mxu0 0.0
        %1481 = vmatpush1.xpose.msra.mxu0 0.0
        %1482 = vmatprep.subr.mxu0 0.0
        %1483 = vmatpush1.xpose.msra.mxu0 0.0
        %1484 = vmatprep.subr.mxu0 0.0
        %1485 = vmatpush1.xpose.msra.mxu0 0.0
        %1486 = vmatprep.subr.mxu0 0.0
        %1487 = vmatpush1.xpose.msra.mxu0 0.0
        %1488 = vmatprep.subr.mxu0 0.0
        %1489 = vmatpush1.xpose.msra.mxu0 0.0
        %1490 = vmatprep.subr.mxu0 0.0
        %1491 = vmatpush1.xpose.msra.mxu0 0.0
        %1492 = vmatprep.subr.mxu0 0.0
        %1493 = vmatpush1.xpose.msra.mxu0 0.0
        %1494 = vmatprep.subr.mxu0 0.0
        %1495 = vmatpush1.xpose.msra.mxu0 0.0
        %1496 = vmatprep.subr.mxu0 0.0
        %1497 = vmatpush1.xpose.msra.mxu0 0.0
        %1498 = vmatprep.subr.mxu0 0.0
        %1499 = vmatpush1.xpose.msra.mxu0 0.0
        %1500 = vmatprep.mubr.f32.mxu0 0.0
        %1501 = vmatmul.mubr.f32.gmra.mrb[0].mxu0 %v1432
        %v1502 = vpop.f32.mrb[0].mxu0
        %v1503 = vadd.f32 %v943, %v1502
        %v1504 = vpop.f32.mrb[0].mxu0
        %1505 = vdwg.mxu0
        %v1506 = vsel %vm945, %v1503, -inf
        %1507 = vmax.xlane.f32.xlu0 %v1506
        %v1508 = vpop.xlane.xlu0 %1507
        %v1509 = vsub.f32 %v1503, %v1508
        %v1510 = vmul.f32 %v1509, 1.442695
        %v1511 = vpow.pop %v1510
        %v1512 = vsel %vm945, %v1511, 0.0
        %1513 = vadd.xlane.f32.xlu0 %v1512
        %v1514 = vpop.xlane.xlu0 %1513
        %v1515 = vrcp.pop %v1514
        %v1516 = vmul.f32 %v1511, %v1515
        %1518 = vrot.lane.b32.xlu0 %v1516, 16
        %v1519 = vpop.permute.xlu0 %1518
        %vm1521 = vcmask 195712
        %1522 = vst.msk [vmem:[%s672] sm:$0xff] %vm1521, %v1519
        %1523 = vrot.lane.b32.xlu0 %v927, 112
        %v1524 = vpop.permute.xlu0 %1523
        %v1526 = vsel %vm945, %v1516, 0
        %1528 = vmatprep.subr.mxu0 0.0
        %1529 = vmatpush1.msra.mxu0 %v1524
        %1530 = vmatprep.subr.mxu0 0.0
        %1531 = vmatpush1.msra.mxu0 0.0
        %1532 = vmatprep.subr.mxu0 0.0
        %1533 = vmatpush1.msra.mxu0 0.0
        %1534 = vmatprep.subr.mxu0 0.0
        %1535 = vmatpush1.msra.mxu0 0.0
        %1536 = vmatprep.subr.mxu0 0.0
        %1537 = vmatpush1.msra.mxu0 0.0
        %1538 = vmatprep.subr.mxu0 0.0
        %1539 = vmatpush1.msra.mxu0 0.0
        %1540 = vmatprep.subr.mxu0 0.0
        %1541 = vmatpush1.msra.mxu0 0.0
        %1542 = vmatprep.subr.mxu0 0.0
        %1543 = vmatpush1.msra.mxu0 0.0
        %1544 = vmatprep.subr.mxu0 0.0
        %1545 = vmatpush1.msra.mxu0 0.0
        %1546 = vmatprep.subr.mxu0 0.0
        %1547 = vmatpush1.msra.mxu0 0.0
        %1548 = vmatprep.subr.mxu0 0.0
        %1549 = vmatpush1.msra.mxu0 0.0
        %1550 = vmatprep.subr.mxu0 0.0
        %1551 = vmatpush1.msra.mxu0 0.0
        %1552 = vmatprep.subr.mxu0 0.0
        %1553 = vmatpush1.msra.mxu0 0.0
        %1554 = vmatprep.subr.mxu0 0.0
        %1555 = vmatpush1.msra.mxu0 0.0
        %1556 = vmatprep.subr.mxu0 0.0
        %1557 = vmatpush1.msra.mxu0 0.0
        %1558 = vmatprep.subr.mxu0 0.0
        %1559 = vmatpush1.msra.mxu0 0.0
        %1560 = vmatprep.subr.mxu0 0.0
        %1561 = vmatpush1.msra.mxu0 0.0
        %1562 = vmatprep.subr.mxu0 0.0
        %1563 = vmatpush1.msra.mxu0 0.0
        %1564 = vmatprep.subr.mxu0 0.0
        %1565 = vmatpush1.msra.mxu0 0.0
        %1566 = vmatprep.subr.mxu0 0.0
        %1567 = vmatpush1.msra.mxu0 0.0
        %1568 = vmatprep.subr.mxu0 0.0
        %1569 = vmatpush1.msra.mxu0 0.0
        %1570 = vmatprep.subr.mxu0 0.0
        %1571 = vmatpush1.msra.mxu0 0.0
        %1572 = vmatprep.subr.mxu0 0.0
        %1573 = vmatpush1.msra.mxu0 0.0
        %1574 = vmatprep.subr.mxu0 0.0
        %1575 = vmatpush1.msra.mxu0 0.0
        %1576 = vmatprep.subr.mxu0 0.0
        %1577 = vmatpush1.msra.mxu0 0.0
        %1578 = vmatprep.subr.mxu0 0.0
        %1579 = vmatpush1.msra.mxu0 0.0
        %1580 = vmatprep.subr.mxu0 0.0
        %1581 = vmatpush1.msra.mxu0 0.0
        %1582 = vmatprep.subr.mxu0 0.0
        %1583 = vmatpush1.msra.mxu0 0.0
        %1584 = vmatprep.subr.mxu0 0.0
        %1585 = vmatpush1.msra.mxu0 0.0
        %1586 = vmatprep.subr.mxu0 0.0
        %1587 = vmatpush1.msra.mxu0 0.0
        %1588 = vmatprep.subr.mxu0 0.0
        %1589 = vmatpush1.msra.mxu0 0.0
        %1590 = vmatprep.subr.mxu0 0.0
        %1591 = vmatpush1.msra.mxu0 0.0
        %1592 = vmatprep.mubr.f32.mxu0 0.0
        %1593 = vmatmul.mubr.f32.gmra.mrb[0].mxu0 %v1526
        %v1594 = vpop.f32.mrb[0].mxu0
        %v1595 = vadd.f32 0.0, %v1594
        %v1596 = vpop.f32.mrb[0].mxu0
        %1597 = vdwg.mxu0
        %v1598 = vld [vmem:[%s10 + $0x10] sm:$0xff]
        %v1600 = vsel %vm945, %v1595, 0
        %1602 = vmatprep.subr.mxu0 0.0
        %1603 = vmatpush1.msra.mxu0 %v1598
        %1604 = vmatprep.subr.mxu0 0.0
        %1605 = vmatpush1.msra.mxu0 0.0
        %1606 = vmatprep.subr.mxu0 0.0
        %1607 = vmatpush1.msra.mxu0 0.0
        %1608 = vmatprep.subr.mxu0 0.0
        %1609 = vmatpush1.msra.mxu0 0.0
        %1610 = vmatprep.subr.mxu0 0.0
        %1611 = vmatpush1.msra.mxu0 0.0
        %1612 = vmatprep.subr.mxu0 0.0
        %1613 = vmatpush1.msra.mxu0 0.0
        %1614 = vmatprep.subr.mxu0 0.0
        %1615 = vmatpush1.msra.mxu0 0.0
        %1616 = vmatprep.subr.mxu0 0.0
        %1617 = vmatpush1.msra.mxu0 0.0
        %1618 = vmatprep.subr.mxu0 0.0
        %1619 = vmatpush1.msra.mxu0 0.0
        %1620 = vmatprep.subr.mxu0 0.0
        %1621 = vmatpush1.msra.mxu0 0.0
        %1622 = vmatprep.subr.mxu0 0.0
        %1623 = vmatpush1.msra.mxu0 0.0
        %1624 = vmatprep.subr.mxu0 0.0
        %1625 = vmatpush1.msra.mxu0 0.0
        %1626 = vmatprep.subr.mxu0 0.0
        %1627 = vmatpush1.msra.mxu0 0.0
        %1628 = vmatprep.subr.mxu0 0.0
        %1629 = vmatpush1.msra.mxu0 0.0
        %1630 = vmatprep.subr.mxu0 0.0
        %1631 = vmatpush1.msra.mxu0 0.0
        %1632 = vmatprep.subr.mxu0 0.0
        %1633 = vmatpush1.msra.mxu0 0.0
        %1634 = vmatprep.subr.mxu0 0.0
        %1635 = vmatpush1.msra.mxu0 0.0
        %1636 = vmatprep.subr.mxu0 0.0
        %1637 = vmatpush1.msra.mxu0 0.0
        %1638 = vmatprep.subr.mxu0 0.0
        %1639 = vmatpush1.msra.mxu0 0.0
        %1640 = vmatprep.subr.mxu0 0.0
        %1641 = vmatpush1.msra.mxu0 0.0
        %1642 = vmatprep.subr.mxu0 0.0
        %1643 = vmatpush1.msra.mxu0 0.0
        %1644 = vmatprep.subr.mxu0 0.0
        %1645 = vmatpush1.msra.mxu0 0.0
        %1646 = vmatprep.subr.mxu0 0.0
        %1647 = vmatpush1.msra.mxu0 0.0
        %1648 = vmatprep.subr.mxu0 0.0
        %1649 = vmatpush1.msra.mxu0 0.0
        %1650 = vmatprep.subr.mxu0 0.0
        %1651 = vmatpush1.msra.mxu0 0.0
        %1652 = vmatprep.subr.mxu0 0.0
        %1653 = vmatpush1.msra.mxu0 0.0
        %1654 = vmatprep.subr.mxu0 0.0
        %1655 = vmatpush1.msra.mxu0 0.0
        %1656 = vmatprep.subr.mxu0 0.0
        %1657 = vmatpush1.msra.mxu0 0.0
        %1658 = vmatprep.subr.mxu0 0.0
        %1659 = vmatpush1.msra.mxu0 0.0
        %1660 = vmatprep.subr.mxu0 0.0
        %1661 = vmatpush1.msra.mxu0 0.0
        %1662 = vmatprep.subr.mxu0 0.0
        %1663 = vmatpush1.msra.mxu0 0.0
        %1664 = vmatprep.subr.mxu0 0.0
        %1665 = vmatpush1.msra.mxu0 0.0
        %1666 = vmatprep.mubr.f32.mxu0 0.0
        %1667 = vmatmul.mubr.f32.gmra.mrb[0].mxu0 %v1600
        %v1668 = vpop.f32.mrb[0].mxu0
        %v1669 = vadd.f32 0.0, %v1668
        %v1670 = vpop.f32.mrb[0].mxu0
        %1671 = vdwg.mxu0
        %v1672 = vadd.f32 %v1427, %v1669
        %1673 = vrot.lane.b32.xlu0 %v761, 104
        %v1674 = vpop.permute.xlu0 %1673
        %1675 = vrot.lane.b32.xlu0 %v843, 104
        %v1676 = vpop.permute.xlu0 %1675
        %v1677 = vsel %vm945, %v1674, 0
        %v1679 = vsel %vm945, %v1676, 0
        %1681 = vmatprep.subr.mxu0 0.0
        %1682 = vmatpush1.xpose.msra.mxu0 %v1679
        %1683 = vmatprep.subr.mxu0 0.0
        %1684 = vmatpush1.xpose.msra.mxu0 0.0
        %1685 = vmatprep.subr.mxu0 0.0
        %1686 = vmatpush1.xpose.msra.mxu0 0.0
        %1687 = vmatprep.subr.mxu0 0.0
        %1688 = vmatpush1.xpose.msra.mxu0 0.0
        %1689 = vmatprep.subr.mxu0 0.0
        %1690 = vmatpush1.xpose.msra.mxu0 0.0
        %1691 = vmatprep.subr.mxu0 0.0
        %1692 = vmatpush1.xpose.msra.mxu0 0.0
        %1693 = vmatprep.subr.mxu0 0.0
        %1694 = vmatpush1.xpose.msra.mxu0 0.0
        %1695 = vmatprep.subr.mxu0 0.0
        %1696 = vmatpush1.xpose.msra.mxu0 0.0
        %1697 = vmatprep.subr.mxu0 0.0
        %1698 = vmatpush1.xpose.msra.mxu0 0.0
        %1699 = vmatprep.subr.mxu0 0.0
        %1700 = vmatpush1.xpose.msra.mxu0 0.0
        %1701 = vmatprep.subr.mxu0 0.0
        %1702 = vmatpush1.xpose.msra.mxu0 0.0
        %1703 = vmatprep.subr.mxu0 0.0
        %1704 = vmatpush1.xpose.msra.mxu0 0.0
        %1705 = vmatprep.subr.mxu0 0.0
        %1706 = vmatpush1.xpose.msra.mxu0 0.0
        %1707 = vmatprep.subr.mxu0 0.0
        %1708 = vmatpush1.xpose.msra.mxu0 0.0
        %1709 = vmatprep.subr.mxu0 0.0
        %1710 = vmatpush1.xpose.msra.mxu0 0.0
        %1711 = vmatprep.subr.mxu0 0.0
        %1712 = vmatpush1.xpose.msra.mxu0 0.0
        %1713 = vmatprep.subr.mxu0 0.0
        %1714 = vmatpush1.xpose.msra.mxu0 0.0
        %1715 = vmatprep.subr.mxu0 0.0
        %1716 = vmatpush1.xpose.msra.mxu0 0.0
        %1717 = vmatprep.subr.mxu0 0.0
        %1718 = vmatpush1.xpose.msra.mxu0 0.0
        %1719 = vmatprep.subr.mxu0 0.0
        %1720 = vmatpush1.xpose.msra.mxu0 0.0
        %1721 = vmatprep.subr.mxu0 0.0
        %1722 = vmatpush1.xpose.msra.mxu0 0.0
        %1723 = vmatprep.subr.mxu0 0.0
        %1724 = vmatpush1.xpose.msra.mxu0 0.0
        %1725 = vmatprep.subr.mxu0 0.0
        %1726 = vmatpush1.xpose.msra.mxu0 0.0
        %1727 = vmatprep.subr.mxu0 0.0
        %1728 = vmatpush1.xpose.msra.mxu0 0.0
        %1729 = vmatprep.subr.mxu0 0.0
        %1730 = vmatpush1.xpose.msra.mxu0 0.0
        %1731 = vmatprep.subr.mxu0 0.0
        %1732 = vmatpush1.xpose.msra.mxu0 0.0
        %1733 = vmatprep.subr.mxu0 0.0
        %1734 = vmatpush1.xpose.msra.mxu0 0.0
        %1735 = vmatprep.subr.mxu0 0.0
        %1736 = vmatpush1.xpose.msra.mxu0 0.0
        %1737 = vmatprep.subr.mxu0 0.0
        %1738 = vmatpush1.xpose.msra.mxu0 0.0
        %1739 = vmatprep.subr.mxu0 0.0
        %1740 = vmatpush1.xpose.msra.mxu0 0.0
        %1741 = vmatprep.subr.mxu0 0.0
        %1742 = vmatpush1.xpose.msra.mxu0 0.0
        %1743 = vmatprep.subr.mxu0 0.0
        %1744 = vmatpush1.xpose.msra.mxu0 0.0
        %1745 = vmatprep.mubr.f32.mxu0 0.0
        %1746 = vmatmul.mubr.f32.gmra.mrb[0].mxu0 %v1677
        %v1747 = vpop.f32.mrb[0].mxu0
        %v1748 = vadd.f32 %v943, %v1747
        %v1749 = vpop.f32.mrb[0].mxu0
        %1750 = vdwg.mxu0
        %v1751 = vsel %vm945, %v1748, -inf
        %1752 = vmax.xlane.f32.xlu0 %v1751
        %v1753 = vpop.xlane.xlu0 %1752
        %v1754 = vsub.f32 %v1748, %v1753
        %v1755 = vmul.f32 %v1754, 1.442695
        %v1756 = vpow.pop %v1755
        %v1757 = vsel %vm945, %v1756, 0.0
        %1758 = vadd.xlane.f32.xlu0 %v1757
        %v1759 = vpop.xlane.xlu0 %1758
        %v1760 = vrcp.pop %v1759
        %v1761 = vmul.f32 %v1756, %v1760
        %1763 = vrot.lane.b32.xlu0 %v1761, 24
        %v1764 = vpop.permute.xlu0 %1763
        %vm1766 = vcmask 261312
        %1767 = vst.msk [vmem:[%s672] sm:$0xff] %vm1766, %v1764
        %1768 = vrot.lane.b32.xlu0 %v927, 104
        %v1769 = vpop.permute.xlu0 %1768
        %v1771 = vsel %vm945, %v1761, 0
        %1773 = vmatprep.subr.mxu0 0.0
        %1774 = vmatpush1.msra.mxu0 %v1769
        %1775 = vmatprep.subr.mxu0 0.0
        %1776 = vmatpush1.msra.mxu0 0.0
        %1777 = vmatprep.subr.mxu0 0.0
        %1778 = vmatpush1.msra.mxu0 0.0
        %1779 = vmatprep.subr.mxu0 0.0
        %1780 = vmatpush1.msra.mxu0 0.0
        %1781 = vmatprep.subr.mxu0 0.0
        %1782 = vmatpush1.msra.mxu0 0.0
        %1783 = vmatprep.subr.mxu0 0.0
        %1784 = vmatpush1.msra.mxu0 0.0
        %1785 = vmatprep.subr.mxu0 0.0
        %1786 = vmatpush1.msra.mxu0 0.0
        %1787 = vmatprep.subr.mxu0 0.0
        %1788 = vmatpush1.msra.mxu0 0.0
        %1789 = vmatprep.subr.mxu0 0.0
        %1790 = vmatpush1.msra.mxu0 0.0
        %1791 = vmatprep.subr.mxu0 0.0
        %1792 = vmatpush1.msra.mxu0 0.0
        %1793 = vmatprep.subr.mxu0 0.0
        %1794 = vmatpush1.msra.mxu0 0.0
        %1795 = vmatprep.subr.mxu0 0.0
        %1796 = vmatpush1.msra.mxu0 0.0
        %1797 = vmatprep.subr.mxu0 0.0
        %1798 = vmatpush1.msra.mxu0 0.0
        %1799 = vmatprep.subr.mxu0 0.0
        %1800 = vmatpush1.msra.mxu0 0.0
        %1801 = vmatprep.subr.mxu0 0.0
        %1802 = vmatpush1.msra.mxu0 0.0
        %1803 = vmatprep.subr.mxu0 0.0
        %1804 = vmatpush1.msra.mxu0 0.0
        %1805 = vmatprep.subr.mxu0 0.0
        %1806 = vmatpush1.msra.mxu0 0.0
        %1807 = vmatprep.subr.mxu0 0.0
        %1808 = vmatpush1.msra.mxu0 0.0
        %1809 = vmatprep.subr.mxu0 0.0
        %1810 = vmatpush1.msra.mxu0 0.0
        %1811 = vmatprep.subr.mxu0 0.0
        %1812 = vmatpush1.msra.mxu0 0.0
        %1813 = vmatprep.subr.mxu0 0.0
        %1814 = vmatpush1.msra.mxu0 0.0
        %1815 = vmatprep.subr.mxu0 0.0
        %1816 = vmatpush1.msra.mxu0 0.0
        %1817 = vmatprep.subr.mxu0 0.0
        %1818 = vmatpush1.msra.mxu0 0.0
        %1819 = vmatprep.subr.mxu0 0.0
        %1820 = vmatpush1.msra.mxu0 0.0
        %1821 = vmatprep.subr.mxu0 0.0
        %1822 = vmatpush1.msra.mxu0 0.0
        %1823 = vmatprep.subr.mxu0 0.0
        %1824 = vmatpush1.msra.mxu0 0.0
        %1825 = vmatprep.subr.mxu0 0.0
        %1826 = vmatpush1.msra.mxu0 0.0
        %1827 = vmatprep.subr.mxu0 0.0
        %1828 = vmatpush1.msra.mxu0 0.0
        %1829 = vmatprep.subr.mxu0 0.0
        %1830 = vmatpush1.msra.mxu0 0.0
        %1831 = vmatprep.subr.mxu0 0.0
        %1832 = vmatpush1.msra.mxu0 0.0
        %1833 = vmatprep.subr.mxu0 0.0
        %1834 = vmatpush1.msra.mxu0 0.0
        %1835 = vmatprep.subr.mxu0 0.0
        %1836 = vmatpush1.msra.mxu0 0.0
        %1837 = vmatprep.mubr.f32.mxu0 0.0
        %1838 = vmatmul.mubr.f32.gmra.mrb[0].mxu0 %v1771
        %v1839 = vpop.f32.mrb[0].mxu0
        %v1840 = vadd.f32 0.0, %v1839
        %v1841 = vpop.f32.mrb[0].mxu0
        %1842 = vdwg.mxu0
        %v1843 = vld [vmem:[%s10 + $0x18] sm:$0xff]
        %v1845 = vsel %vm945, %v1840, 0
        %1847 = vmatprep.subr.mxu0 0.0
        %1848 = vmatpush1.msra.mxu0 %v1843
        %1849 = vmatprep.subr.mxu0 0.0
        %1850 = vmatpush1.msra.mxu0 0.0
        %1851 = vmatprep.subr.mxu0 0.0
        %1852 = vmatpush1.msra.mxu0 0.0
        %1853 = vmatprep.subr.mxu0 0.0
        %1854 = vmatpush1.msra.mxu0 0.0
        %1855 = vmatprep.subr.mxu0 0.0
        %1856 = vmatpush1.msra.mxu0 0.0
        %1857 = vmatprep.subr.mxu0 0.0
        %1858 = vmatpush1.msra.mxu0 0.0
        %1859 = vmatprep.subr.mxu0 0.0
        %1860 = vmatpush1.msra.mxu0 0.0
        %1861 = vmatprep.subr.mxu0 0.0
        %1862 = vmatpush1.msra.mxu0 0.0
        %1863 = vmatprep.subr.mxu0 0.0
        %1864 = vmatpush1.msra.mxu0 0.0
        %1865 = vmatprep.subr.mxu0 0.0
        %1866 = vmatpush1.msra.mxu0 0.0
        %1867 = vmatprep.subr.mxu0 0.0
        %1868 = vmatpush1.msra.mxu0 0.0
        %1869 = vmatprep.subr.mxu0 0.0
        %1870 = vmatpush1.msra.mxu0 0.0
        %1871 = vmatprep.subr.mxu0 0.0
        %1872 = vmatpush1.msra.mxu0 0.0
        %1873 = vmatprep.subr.mxu0 0.0
        %1874 = vmatpush1.msra.mxu0 0.0
        %1875 = vmatprep.subr.mxu0 0.0
        %1876 = vmatpush1.msra.mxu0 0.0
        %1877 = vmatprep.subr.mxu0 0.0
        %1878 = vmatpush1.msra.mxu0 0.0
        %1879 = vmatprep.subr.mxu0 0.0
        %1880 = vmatpush1.msra.mxu0 0.0
        %1881 = vmatprep.subr.mxu0 0.0
        %1882 = vmatpush1.msra.mxu0 0.0
        %1883 = vmatprep.subr.mxu0 0.0
        %1884 = vmatpush1.msra.mxu0 0.0
        %1885 = vmatprep.subr.mxu0 0.0
        %1886 = vmatpush1.msra.mxu0 0.0
        %1887 = vmatprep.subr.mxu0 0.0
        %1888 = vmatpush1.msra.mxu0 0.0
        %1889 = vmatprep.subr.mxu0 0.0
        %1890 = vmatpush1.msra.mxu0 0.0
        %1891 = vmatprep.subr.mxu0 0.0
        %1892 = vmatpush1.msra.mxu0 0.0
        %1893 = vmatprep.subr.mxu0 0.0
        %1894 = vmatpush1.msra.mxu0 0.0
        %1895 = vmatprep.subr.mxu0 0.0
        %1896 = vmatpush1.msra.mxu0 0.0
        %1897 = vmatprep.subr.mxu0 0.0
        %1898 = vmatpush1.msra.mxu0 0.0
        %1899 = vmatprep.subr.mxu0 0.0
        %1900 = vmatpush1.msra.mxu0 0.0
        %1901 = vmatprep.subr.mxu0 0.0
        %1902 = vmatpush1.msra.mxu0 0.0
        %1903 = vmatprep.subr.mxu0 0.0
        %1904 = vmatpush1.msra.mxu0 0.0
        %1905 = vmatprep.subr.mxu0 0.0
        %1906 = vmatpush1.msra.mxu0 0.0
        %1907 = vmatprep.subr.mxu0 0.0
        %1908 = vmatpush1.msra.mxu0 0.0
        %1909 = vmatprep.subr.mxu0 0.0
        %1910 = vmatpush1.msra.mxu0 0.0
        %1911 = vmatprep.mubr.f32.mxu0 0.0
        %1912 = vmatmul.mubr.f32.gmra.mrb[0].mxu0 %v1845
        %v1913 = vpop.f32.mrb[0].mxu0
        %v1914 = vadd.f32 0.0, %v1913
        %v1915 = vpop.f32.mrb[0].mxu0
        %1916 = vdwg.mxu0
        %v1917 = vadd.f32 %v1672, %v1914
        %v1918 = vsel %vm687, %v1917, 0.0
        %1919 = vadd.xlane.f32.xlu0 %v1918
        %v1920 = vpop.xlane.xlu0 %1919
        %v1921 = vrcp.pop 32.0
        %v1922 = vmul.f32 %v1920, %v1921
        %v1923 = vsub.f32 %v1917, %v1922
        %v1924 = vmul.f32 %v1923, %v1923
        %v1925 = vsel %vm687, %v1924, 0.0
        %1926 = vadd.xlane.f32.xlu0 %v1925
        %v1927 = vpop.xlane.xlu0 %1926
        %v1928 = vmul.f32 %v1927, %v1921
        %v1929 = vadd.f32 %v1928, 1e-05
        %v1930 = vrsqrt.pop %v1929
        %v1931 = vmul.f32 %v1923, %v1930
        %v1932 = vld [vmem:[%s12] sm:$0x1]
        %v1934 = vlaneseq
        %v1935 = vshrl.u32 %v1934, 7
        %v1936 = vsub.s32 0, %v1935
        %v1937 = vrot.slane %v1932, %v1936
        %v1939 = vmul.f32 %v1931, %v1937
        %v1940 = vld [vmem:[%s13] sm:$0x1]
        %v1942 = vlaneseq
        %v1943 = vshrl.u32 %v1942, 7
        %v1944 = vsub.s32 0, %v1943
        %v1945 = vrot.slane %v1940, %v1944
        %v1947 = vadd.f32 %v1939, %v1945
        %1948 = vst.msk [vmem:[%s659] sm:$0xff] %vm687, %v1947
        %s1949 = sand.u32 %s361, 1
        %s1950 = scalar_lea.sflag [#allocation4], %s1949
        %s1951 = sand.u32 %s361, 1
        %s1952 = smul.addr %s1951, 8
        %s1953 = scalar_lea.vmem [#allocation16], %s1952
        %p1954 = scmp.lt.s32.totalorder %s39, 1
        %s1955 = scalar_select %p1954, %s39, 1
        %s1956 = smul.addr %s1955, 8
        %s1957 = scalar_lea.vmem %s15, %s1956
        // Predicated region
        $region109: #{multi_head_attention.1} parent=75 // pred_check
          %p1958 = pneg %p371
        $region110: #{multi_head_attention.1} parent=75 // pred_check_branch
          %1960 = sbr.rel (%p1958) target = $region112
        $region111: #{multi_head_attention.1} parent=75 // pred_region
          %s1962 = ssub.s32 128, 128
          %1963 = vsyncadd %s1950, %s1962
          %s1964 = smul.addr %s39, 128
          %s1965 = scalar_lea.hbm %s14, %s1964
          %s1967 = sshll.u32 %s1953, 4
          %s1968 = int_to_ptr.vmem [resolvable:$true] %s1967
          %1970 = dma.vmem_to_hbm [thread:$0]  %s1968, 128, %s1965, %s1950
        $region112: #{multi_head_attention.1} parent=75 // pred_fallthru
          _
        // Predicated region
        $region113: #{multi_head_attention.1} parent=75 // pred_check
          %p1971 = pneg %p397
        $region114: #{multi_head_attention.1} parent=75 // pred_check_branch
          %1973 = sbr.rel (%p1971) target = $region116
        $region115: #{multi_head_attention.1} parent=75 // pred_region
          _
        $region116: #{multi_head_attention.1} parent=75 // pred_fallthru
          _
      $region76: #{multi_head_attention.1} parent=5 // pred_fallthru
        _
      %p1974 = scmp.le.s32.totalorder 2, %s34
      // Predicated region
      $region117: #{multi_head_attention.1} parent=5 // pred_check
        %p1975 = pneg %p1974
      $region118: #{multi_head_attention.1} parent=5 // pred_check_branch
        %1977 = sbr.rel (%p1975) target = $region120
      $region119: #{multi_head_attention.1} parent=5 // pred_region
        %s1978 = ssub.s32 %s34, 2
        // Predicated region
        $region121: #{multi_head_attention.1} parent=119 // pred_check
          %p1979 = pneg %p377
        $region122: #{multi_head_attention.1} parent=119 // pred_check_branch
          %1981 = sbr.rel (%p1979) target = $region124
        $region123: #{multi_head_attention.1} parent=119 // pred_region
          %s1982 = sand.u32 %s362, 1
          %s1983 = scalar_lea.sflag [#allocation4], %s1982
          %s1984 = sand.u32 %s362, 1
          %s1985 = smul.addr %s1984, 8
          %s1986 = scalar_lea.vmem [#allocation16], %s1985
          %1987 = dma.done %s1983, 128
        $region124: #{multi_head_attention.1} parent=119 // pred_fallthru
          _
        // Predicated region
        $region125: #{multi_head_attention.1} parent=119 // pred_check
          %p1988 = pneg %p403
        $region126: #{multi_head_attention.1} parent=119 // pred_check_branch
          %1990 = sbr.rel (%p1988) target = $region128
        $region127: #{multi_head_attention.1} parent=119 // pred_region
          %p1991 = scmp.lt.s32.totalorder %s40, 1
          %s1992 = scalar_select %p1991, %s40, 1
          %s1993 = smul.addr %s1992, 8
          %s1994 = scalar_lea.vmem %s15, %s1993
        $region128: #{multi_head_attention.1} parent=119 // pred_fallthru
          _
      $region120: #{multi_head_attention.1} parent=5 // pred_fallthru
        _
    $region6: #{multi_head_attention.1} parent=1 // loop_footer
      %s38 = sadd.s32 1, %s34
    $region7: #{multi_head_attention.1} parent=1 // loop_footer_branch
      %33 = sbr.rel target = $region3
    $region8: #{multi_head_attention.1} parent=1 // loop_exit
      _
    %1995 = vsyncpa [#allocation3], 1
    %s1996 = scalar_lea.sflag [#allocation3], 1
    %1997 = vsyncpa %s1996, 1
    %1998 = vsyncpa [#allocation6], 1
    %s1999 = scalar_lea.sflag [#allocation6], 1
    %2000 = vsyncpa %s1999, 1
    %2001 = vsyncpa [#allocation9], 1
    %2002 = vsyncpa [#allocation12], 1
    %2003 = vsyncpa [#allocation15], 1
    %2004 = vsyncpa [#allocation4], 1
    %s2005 = scalar_lea.sflag [#allocation4], 1
    %2006 = vsyncpa %s2005, 1

</llo_original>
